<compile_context>
chip_gen: v7x
topology: tpu7x:2x2x1
jax: 0.10.0
libtpu: 0.0.40
codegen_flags: <defaults>
</compile_context>

<pallas_src>
import numpy as np
import jax
import jax.numpy as jnp
from jax.experimental import pallas as pl
from jax.experimental.pallas import tpu as pltpu


def _round_up(n, m):
    return ((n + m - 1) // m) * m


# ----------------------------------------------------------------------------
# Pallas kernel: fused masked-MLP forward for one batch tile.
# refs layout: (x_ref, w1_ref, b1_ref, ..., wL_ref, bL_ref, o_ref)
# ----------------------------------------------------------------------------
def made_kernel(*refs):
    x_ref = refs[0]
    o_ref = refs[-1]
    params = refs[1:-1]
    n_layers = len(params) // 2

    h = x_ref[...]                          # (TB, D) f32 activations
    for l in range(n_layers):
        w = params[2 * l][...]              # (in_p, out_p)  bf16 (or f32)
        b = params[2 * l + 1][...]          # (1, out_p)     f32
        # Cast activations to the weight dtype only for the MXU op; accumulate
        # in f32 and keep all elementwise work (bias/ReLU/store) in f32.
        h = jnp.dot(h.astype(w.dtype), w,
                    preferred_element_type=jnp.float32) + b
        if l < n_layers - 1:                # ReLU on all but the last layer
            h = jnp.maximum(h, 0.0)
    o_ref[...] = h.astype(o_ref.dtype)


# ----------------------------------------------------------------------------
# Host wrapper: batch tiling, resident weights, VMEM budgeting.
# ----------------------------------------------------------------------------
def made_forward(x, weights, biases, *, out_dim, batch_tile=1024,
                 out_dtype=jnp.float32):
    """x: (B, D) f32; weights[l]: (in_p, out_p) padded; biases[l]: (out_p,)."""
    B, D = x.shape
    out_p = int(weights[-1].shape[1])       # padded (multiple of 128) lanes
    out_itemsize = jnp.dtype(out_dtype).itemsize

    # ---- batch tile: large (MXU M dim / fewer grid steps), multiple of 8,
    # ---- but keep >=2 tiles when possible so both v7x TCs get work ---------
    TB = min(batch_tile, _round_up(B, 8))
    TB = max(8, (TB // 8) * 8)
    Bp = _round_up(B, TB)
    while Bp // TB < 2 and TB > 8:
        TB = max(8, _round_up(TB // 2, 8))
        Bp = _round_up(B, TB)

    xp = x if Bp == B else jnp.pad(x, ((0, Bp - B), (0, 0)))
    biases2d = [b.reshape(1, -1).astype(jnp.float32) for b in biases]

    # ---- cost / VMEM accounting --------------------------------------------
    param_bytes = sum(int(w.size) * w.dtype.itemsize for w in weights) + \
                  sum(int(b.size) * b.dtype.itemsize for b in biases2d)
    flops = sum(2 * Bp * int(w.shape[0]) * int(w.shape[1]) for w in weights)
    io_bytes = int(xp.size) * 4 + param_bytes + Bp * out_p * out_itemsize

    widest = max(max(int(w.shape[1]) for w in weights), D)
    vmem_est = (param_bytes                                   # resident params (x1)
                + 2 * TB * (D * 4 + out_p * out_itemsize)     # dbl-buffered x/out
                + 2 * 4 * TB * widest                         # h_in + f32 acc live
                + 2 * 1024 * 1024)                            # compiler scratch

    try:
        vmem_cap = int(pltpu.get_tpu_info().vmem_capacity_bytes)
    except Exception:
        vmem_cap = 64 * 1024 * 1024         # conservative v7x per-TC floor
    vmem_limit = int(0.8 * vmem_cap)        # ~100 MiB v5e/v6e, ~51 MiB v7x
    if vmem_est > vmem_limit:
        raise ValueError(
            f"MADE working set ~{vmem_est >> 20} MiB exceeds VMEM budget "
            f"{vmem_limit >> 20} MiB; reduce batch_tile or stream weight "
            f"tiles (see TODO in made_kernel).")

    def run(single_buffer_params):
        pmode = pl.Buffered(1) if single_buffer_params else None
        args = [xp]
        in_specs = [pl.BlockSpec((TB, D), lambda i: (i, 0))]
        for w, b2d in zip(weights, biases2d):
            args += [w, b2d]
            kw = {"pipeline_mode": pmode} if pmode is not None else {}
            # Constant block index -> weights/biases stay resident in VMEM
            # across all batch-tile steps (no re-DMA per step).
            in_specs += [pl.BlockSpec(w.shape, lambda i: (0, 0), **kw),
                         pl.BlockSpec(b2d.shape, lambda i: (0, 0), **kw)]
        return pl.pallas_call(
            made_kernel,
            grid=(Bp // TB,),
            in_specs=in_specs,
            out_specs=pl.BlockSpec((TB, out_p), lambda i: (i, 0)),
            out_shape=jax.ShapeDtypeStruct((Bp, out_p), out_dtype),
            compiler_params=pltpu.CompilerParams(
                dimension_semantics=("parallel",),   # batch tiles independent
                vmem_limit_bytes=vmem_limit),
            cost_estimate=pl.CostEstimate(
                flops=flops, transcendentals=0, bytes_accessed=io_bytes),
        )(*args)

    try:
        out = run(True)     # single-buffered resident params (halves param VMEM)
    except Exception:       # pipeline_mode not accepted on this build: fall back
        out = run(False)
    return out[:B, :out_dim]


# ----------------------------------------------------------------------------
# Deterministic parameter / mask construction (mirrors MADE.__init__).
# Masks use `>=` on every layer, exactly as the reference module does, and are
# applied to the (out, in) nn.Linear-layout weights (module intent).
# ----------------------------------------------------------------------------
def build_made_params(input_dim, hidden_dims, output_dim_per_input, seed=0,
                      param_dtype=jnp.bfloat16):
    dims = [input_dim] + list(hidden_dims) + [input_dim * output_dim_per_input]

    rng = np.random.RandomState(seed)
    degrees = [np.arange(input_dim)]
    for h in hidden_dims:
        min_prev = int(min(degrees[-1]))
        degrees.append(rng.randint(min_prev, input_dim - 1, size=h))
    degrees.append(np.hstack([np.arange(input_dim)
                              for _ in range(output_dim_per_input)]))

    masks = []
    for i in range(len(dims) - 1):
        # (out_dim, in_dim), matching nn.Linear.weight layout.
        masks.append((degrees[i + 1].reshape(-1, 1) >= degrees[i])
                     .astype(np.float32))

    # Deterministic nn.Linear-style init, masks baked into the weights
    # (MADE.apply_masks).  Kernel wants (in, out), so transpose once here.
    key = jax.random.PRNGKey(seed)
    weights, biases = [], []
    for i in range(len(dims) - 1):
        fan_in, fan_out = dims[i], dims[i + 1]
        key, kw, kb = jax.random.split(key, 3)
        bound = 1.0 / np.sqrt(fan_in)
        w = jax.random.uniform(kw, (fan_out, fan_in), jnp.float32,
                               -bound, bound)           # (out, in)
        b = jax.random.uniform(kb, (fan_out,), jnp.float32, -bound, bound)
        w = w * jnp.asarray(masks[i])                   # bake autoregressive mask
        weights.append(jnp.asarray(w.T).astype(param_dtype))   # -> (in, out)
        biases.append(jnp.asarray(b))                   # biases stay f32
    return weights, biases


def pad_params(weights, biases, lane=128):
    """Zero-pad feature dims to multiples of `lane` (layer-0 input kept as-is).

    Zero padding is exact: padded hidden units get 0 pre-activation, ReLU keeps
    them 0, and the padded rows of the next weight are 0, so results for the
    real columns are bit-for-bit equivalent to the unpadded network.
    """
    padded_w, padded_b = [], []
    for l, (w, b) in enumerate(zip(weights, biases)):
        in_dim, out_dim = w.shape
        in_p = in_dim if l == 0 else _round_up(in_dim, lane)
        out_p = _round_up(out_dim, lane)
        wp = jnp.zeros((in_p, out_p), w.dtype).at[:in_dim, :out_dim].set(w)
        bp = jnp.zeros((out_p,), b.dtype).at[:out_dim].set(b)
        padded_w.append(wp)
        padded_b.append(bp)
    return padded_w, padded_b


def made_reference(x, weights, biases, compute_dtype=jnp.float32):
    """Pure-JAX reference on the unpadded params (precision-matched)."""
    h = x
    for l, (w, b) in enumerate(zip(weights, biases)):
        h = jnp.dot(h.astype(compute_dtype), w.astype(compute_dtype),
                    preferred_element_type=jnp.float32,
                    precision=jax.lax.Precision.HIGHEST) + b
        if l < len(weights) - 1:
            h = jnp.maximum(h, 0.0)
    return h


if __name__ == "__main__":
    input_dim = 8
    hidden_dims = [64, 64]
    output_dim_per_input = 2
    batch = 512                      # tiled into >=2 batch tiles (v7x megacore)
    out_dim = input_dim * output_dim_per_input

    key = jax.random.PRNGKey(0)
    x = jax.random.normal(key, (batch, input_dim), dtype=jnp.float32)

    # ---- default path: bf16 weights on every generation, f32 accumulation --
    w16, b16 = build_made_params(input_dim, hidden_dims,
                                 output_dim_per_input, seed=0)   # bf16 default
    wp16, bp16 = pad_params(w16, b16)
    out16 = made_forward(x, wp16, bp16, out_dim=out_dim)
    out16 = jax.block_until_ready(out16)
    ref16 = made_reference(x, w16, b16, compute_dtype=jnp.bfloat16)
    assert out16.shape == (batch, out_dim)
    np.testing.assert_allclose(np.asarray(out16), np.asarray(ref16),
                               atol=2e-2, rtol=2e-2)

    # ---- f32 weights: tighter numerics check (same kernel, no code change) --
    w32, b32 = build_made_params(input_dim, hidden_dims,
                                 output_dim_per_input, seed=0,
                                 param_dtype=jnp.float32)
    wp32, bp32 = pad_params(w32, b32)
    out32 = made_forward(x, wp32, bp32, out_dim=out_dim)
    out32 = jax.block_until_ready(out32)
    ref32 = made_reference(x, w32, b32)
    assert out32.shape == (batch, out_dim)
    np.testing.assert_allclose(np.asarray(out32), np.asarray(ref32),
                               atol=1e-3, rtol=1e-3)

    print("KERNEL_OK")
</pallas_src>

<mosaic_0001>
module attributes {stable_mosaic.version = 11 : i64} {
  func.func @made_kernel(%arg0: i32, %arg1: memref<256x8xf32, #tpu.memory_space<vmem>>, %arg2: memref<8x128xbf16, #tpu.memory_space<vmem>>, %arg3: memref<1x128xf32, #tpu.memory_space<vmem>>, %arg4: memref<128x128xbf16, #tpu.memory_space<vmem>>, %arg5: memref<1x128xf32, #tpu.memory_space<vmem>>, %arg6: memref<128x128xbf16, #tpu.memory_space<vmem>>, %arg7: memref<1x128xf32, #tpu.memory_space<vmem>>, %arg8: memref<256x128xf32, #tpu.memory_space<vmem>>) attributes {dimension_semantics = [#tpu.dimension_semantics<parallel>], iteration_bounds = array<i64: 2>, scalar_prefetch = 0 : i64, scratch_operands = 0 : i64, tpu.core_type = #tpu.core_type<tc>, window_params = [{transform_indices = @transform_0, window_bounds = array<i64: 256, 8>}, {pipeline_mode = #tpu.pipeline_mode<synchronous>, transform_indices = @transform_1, window_bounds = array<i64: 8, 128>}, {pipeline_mode = #tpu.pipeline_mode<synchronous>, transform_indices = @transform_2, window_bounds = array<i64: 1, 128>}, {pipeline_mode = #tpu.pipeline_mode<synchronous>, transform_indices = @transform_3, window_bounds = array<i64: 128, 128>}, {pipeline_mode = #tpu.pipeline_mode<synchronous>, transform_indices = @transform_4, window_bounds = array<i64: 1, 128>}, {pipeline_mode = #tpu.pipeline_mode<synchronous>, transform_indices = @transform_5, window_bounds = array<i64: 128, 128>}, {pipeline_mode = #tpu.pipeline_mode<synchronous>, transform_indices = @transform_6, window_bounds = array<i64: 1, 128>}, {transform_indices = @transform_7, window_bounds = array<i64: 256, 128>}]} {
    %c0 = arith.constant 0 : index
    %c0_0 = arith.constant 0 : index
    %0 = vector.load %arg1[%c0, %c0_0] : memref<256x8xf32, #tpu.memory_space<vmem>>, vector<256x8xf32>
    %c0_1 = arith.constant 0 : index
    %c0_2 = arith.constant 0 : index
    %1 = vector.load %arg2[%c0_1, %c0_2] : memref<8x128xbf16, #tpu.memory_space<vmem>>, vector<8x128xbf16>
    %c0_3 = arith.constant 0 : index
    %c0_4 = arith.constant 0 : index
    %2 = vector.load %arg3[%c0_3, %c0_4] : memref<1x128xf32, #tpu.memory_space<vmem>>, vector<1x128xf32>
    %3 = arith.truncf %0 : vector<256x8xf32> to vector<256x8xbf16>
    %cst = arith.constant dense<0.000000e+00> : vector<256x128xf32>
    %4 = tpu.matmul %3, %1, %cst {dimension_numbers = #tpu.dot_dimension_numbers<[1], [0], [0], [1], [0, 0, 1, 1], [], []>} : vector<256x8xbf16>, vector<8x128xbf16>, vector<256x128xf32> -> vector<256x128xf32>
    %5 = vector.broadcast %2 : vector<1x128xf32> to vector<256x128xf32>
    %6 = arith.addf %4, %5 : vector<256x128xf32>
    %cst_5 = arith.constant 0.000000e+00 : f32
    %7 = vector.broadcast %cst_5 : f32 to vector<256x128xf32>
    %8 = arith.maximumf %6, %7 : vector<256x128xf32>
    %c0_6 = arith.constant 0 : index
    %c0_7 = arith.constant 0 : index
    %9 = vector.load %arg4[%c0_6, %c0_7] : memref<128x128xbf16, #tpu.memory_space<vmem>>, vector<128x128xbf16>
    %c0_8 = arith.constant 0 : index
    %c0_9 = arith.constant 0 : index
    %10 = vector.load %arg5[%c0_8, %c0_9] : memref<1x128xf32, #tpu.memory_space<vmem>>, vector<1x128xf32>
    %11 = arith.truncf %8 : vector<256x128xf32> to vector<256x128xbf16>
    %cst_10 = arith.constant dense<0.000000e+00> : vector<256x128xf32>
    %12 = tpu.matmul %11, %9, %cst_10 {dimension_numbers = #tpu.dot_dimension_numbers<[1], [0], [0], [1], [0, 0, 1, 1], [], []>} : vector<256x128xbf16>, vector<128x128xbf16>, vector<256x128xf32> -> vector<256x128xf32>
    %13 = vector.broadcast %10 : vector<1x128xf32> to vector<256x128xf32>
    %14 = arith.addf %12, %13 : vector<256x128xf32>
    %cst_11 = arith.constant 0.000000e+00 : f32
    %15 = vector.broadcast %cst_11 : f32 to vector<256x128xf32>
    %16 = arith.maximumf %14, %15 : vector<256x128xf32>
    %c0_12 = arith.constant 0 : index
    %c0_13 = arith.constant 0 : index
    %17 = vector.load %arg6[%c0_12, %c0_13] : memref<128x128xbf16, #tpu.memory_space<vmem>>, vector<128x128xbf16>
    %c0_14 = arith.constant 0 : index
    %c0_15 = arith.constant 0 : index
    %18 = vector.load %arg7[%c0_14, %c0_15] : memref<1x128xf32, #tpu.memory_space<vmem>>, vector<1x128xf32>
    %19 = arith.truncf %16 : vector<256x128xf32> to vector<256x128xbf16>
    %cst_16 = arith.constant dense<0.000000e+00> : vector<256x128xf32>
    %20 = tpu.matmul %19, %17, %cst_16 {dimension_numbers = #tpu.dot_dimension_numbers<[1], [0], [0], [1], [0, 0, 1, 1], [], []>} : vector<256x128xbf16>, vector<128x128xbf16>, vector<256x128xf32> -> vector<256x128xf32>
    %21 = vector.broadcast %18 : vector<1x128xf32> to vector<256x128xf32>
    %22 = arith.addf %20, %21 : vector<256x128xf32>
    %c0_17 = arith.constant 0 : index
    %c0_18 = arith.constant 0 : index
    %23 = vector.load %arg8[%c0_17, %c0_18] : memref<256x128xf32, #tpu.memory_space<vmem>>, vector<256x128xf32>
    tpu.vector_store %arg8[%c0_17, %c0_18], %22 {strides = array<i32>} : memref<256x128xf32, #tpu.memory_space<vmem>>, vector<256x128xf32>,
    return
  }
  func.func @transform_0(%arg0: i32) -> (i32, i32) {
    %c0_i32 = arith.constant 0 : i32
    %c0_i32_0 = arith.constant 0 : i32
    return %arg0, %c0_i32 : i32, i32
  }
  func.func @transform_1(%arg0: i32) -> (i32, i32) {
    %c0_i32 = arith.constant 0 : i32
    %c0_i32_0 = arith.constant 0 : i32
    %c0_i32_1 = arith.constant 0 : i32
    return %c0_i32, %c0_i32_0 : i32, i32
  }
  func.func @transform_2(%arg0: i32) -> (i32, i32) {
    %c0_i32 = arith.constant 0 : i32
    %c0_i32_0 = arith.constant 0 : i32
    %c0_i32_1 = arith.constant 0 : i32
    return %c0_i32, %c0_i32_0 : i32, i32
  }
  func.func @transform_3(%arg0: i32) -> (i32, i32) {
    %c0_i32 = arith.constant 0 : i32
    %c0_i32_0 = arith.constant 0 : i32
    %c0_i32_1 = arith.constant 0 : i32
    return %c0_i32, %c0_i32_0 : i32, i32
  }
  func.func @transform_4(%arg0: i32) -> (i32, i32) {
    %c0_i32 = arith.constant 0 : i32
    %c0_i32_0 = arith.constant 0 : i32
    %c0_i32_1 = arith.constant 0 : i32
    return %c0_i32, %c0_i32_0 : i32, i32
  }
  func.func @transform_5(%arg0: i32) -> (i32, i32) {
    %c0_i32 = arith.constant 0 : i32
    %c0_i32_0 = arith.constant 0 : i32
    %c0_i32_1 = arith.constant 0 : i32
    return %c0_i32, %c0_i32_0 : i32, i32
  }
  func.func @transform_6(%arg0: i32) -> (i32, i32) {
    %c0_i32 = arith.constant 0 : i32
    %c0_i32_0 = arith.constant 0 : i32
    %c0_i32_1 = arith.constant 0 : i32
    return %c0_i32, %c0_i32_0 : i32, i32
  }
  func.func @transform_7(%arg0: i32) -> (i32, i32) {
    %c0_i32 = arith.constant 0 : i32
    %c0_i32_0 = arith.constant 0 : i32
    return %arg0, %c0_i32 : i32, i32
  }
}

module attributes {stable_mosaic.version = 11 : i64} {
  func.func @made_kernel(%arg0: i32, %arg1: memref<256x8xf32, #tpu.memory_space<vmem>>, %arg2: memref<8x128xbf16, #tpu.memory_space<vmem>>, %arg3: memref<1x128xf32, #tpu.memory_space<vmem>>, %arg4: memref<128x128xbf16, #tpu.memory_space<vmem>>, %arg5: memref<1x128xf32, #tpu.memory_space<vmem>>, %arg6: memref<128x128xbf16, #tpu.memory_space<vmem>>, %arg7: memref<1x128xf32, #tpu.memory_space<vmem>>, %arg8: memref<256x128xf32, #tpu.memory_space<vmem>>) attributes {dimension_semantics = [#tpu.dimension_semantics<parallel>], iteration_bounds = array<i64: 2>, scalar_prefetch = 0 : i64, scratch_operands = 0 : i64, tpu.core_type = #tpu.core_type<tc>, window_params = [{transform_indices = @transform_0, window_bounds = array<i64: 256, 8>}, {pipeline_mode = #tpu.pipeline_mode<synchronous>, transform_indices = @transform_1, window_bounds = array<i64: 8, 128>}, {pipeline_mode = #tpu.pipeline_mode<synchronous>, transform_indices = @transform_2, window_bounds = array<i64: 1, 128>}, {pipeline_mode = #tpu.pipeline_mode<synchronous>, transform_indices = @transform_3, window_bounds = array<i64: 128, 128>}, {pipeline_mode = #tpu.pipeline_mode<synchronous>, transform_indices = @transform_4, window_bounds = array<i64: 1, 128>}, {pipeline_mode = #tpu.pipeline_mode<synchronous>, transform_indices = @transform_5, window_bounds = array<i64: 128, 128>}, {pipeline_mode = #tpu.pipeline_mode<synchronous>, transform_indices = @transform_6, window_bounds = array<i64: 1, 128>}, {transform_indices = @transform_7, window_bounds = array<i64: 256, 128>}]} {
    %c0 = arith.constant 0 : index
    %c0_0 = arith.constant 0 : index
    %0 = vector.load %arg1[%c0, %c0_0] : memref<256x8xf32, #tpu.memory_space<vmem>>, vector<256x8xf32>
    %c0_1 = arith.constant 0 : index
    %c0_2 = arith.constant 0 : index
    %1 = vector.load %arg2[%c0_1, %c0_2] : memref<8x128xbf16, #tpu.memory_space<vmem>>, vector<8x128xbf16>
    %c0_3 = arith.constant 0 : index
    %c0_4 = arith.constant 0 : index
    %2 = vector.load %arg3[%c0_3, %c0_4] : memref<1x128xf32, #tpu.memory_space<vmem>>, vector<1x128xf32>
    %3 = arith.truncf %0 : vector<256x8xf32> to vector<256x8xbf16>
    %cst = arith.constant dense<0.000000e+00> : vector<256x128xf32>
    %4 = tpu.matmul %3, %1, %cst {dimension_numbers = #tpu.dot_dimension_numbers<[1], [0], [0], [1], [0, 0, 1, 1], [], []>} : vector<256x8xbf16>, vector<8x128xbf16>, vector<256x128xf32> -> vector<256x128xf32>
    %5 = vector.broadcast %2 : vector<1x128xf32> to vector<256x128xf32>
    %6 = arith.addf %4, %5 : vector<256x128xf32>
    %cst_5 = arith.constant 0.000000e+00 : f32
    %7 = vector.broadcast %cst_5 : f32 to vector<256x128xf32>
    %8 = arith.maximumf %6, %7 : vector<256x128xf32>
    %c0_6 = arith.constant 0 : index
    %c0_7 = arith.constant 0 : index
    %9 = vector.load %arg4[%c0_6, %c0_7] : memref<128x128xbf16, #tpu.memory_space<vmem>>, vector<128x128xbf16>
    %c0_8 = arith.constant 0 : index
    %c0_9 = arith.constant 0 : index
    %10 = vector.load %arg5[%c0_8, %c0_9] : memref<1x128xf32, #tpu.memory_space<vmem>>, vector<1x128xf32>
    %11 = arith.truncf %8 : vector<256x128xf32> to vector<256x128xbf16>
    %cst_10 = arith.constant dense<0.000000e+00> : vector<256x128xf32>
    %12 = tpu.matmul %11, %9, %cst_10 {dimension_numbers = #tpu.dot_dimension_numbers<[1], [0], [0], [1], [0, 0, 1, 1], [], []>} : vector<256x128xbf16>, vector<128x128xbf16>, vector<256x128xf32> -> vector<256x128xf32>
    %13 = vector.broadcast %10 : vector<1x128xf32> to vector<256x128xf32>
    %14 = arith.addf %12, %13 : vector<256x128xf32>
    %cst_11 = arith.constant 0.000000e+00 : f32
    %15 = vector.broadcast %cst_11 : f32 to vector<256x128xf32>
    %16 = arith.maximumf %14, %15 : vector<256x128xf32>
    %c0_12 = arith.constant 0 : index
    %c0_13 = arith.constant 0 : index
    %17 = vector.load %arg6[%c0_12, %c0_13] : memref<128x128xbf16, #tpu.memory_space<vmem>>, vector<128x128xbf16>
    %c0_14 = arith.constant 0 : index
    %c0_15 = arith.constant 0 : index
    %18 = vector.load %arg7[%c0_14, %c0_15] : memref<1x128xf32, #tpu.memory_space<vmem>>, vector<1x128xf32>
    %19 = arith.truncf %16 : vector<256x128xf32> to vector<256x128xbf16>
    %cst_16 = arith.constant dense<0.000000e+00> : vector<256x128xf32>
    %20 = tpu.matmul %19, %17, %cst_16 {dimension_numbers = #tpu.dot_dimension_numbers<[1], [0], [0], [1], [0, 0, 1, 1], [], []>} : vector<256x128xbf16>, vector<128x128xbf16>, vector<256x128xf32> -> vector<256x128xf32>
    %21 = vector.broadcast %18 : vector<1x128xf32> to vector<256x128xf32>
    %22 = arith.addf %20, %21 : vector<256x128xf32>
    %c0_17 = arith.constant 0 : index
    %c0_18 = arith.constant 0 : index
    %23 = vector.load %arg8[%c0_17, %c0_18] : memref<256x128xf32, #tpu.memory_space<vmem>>, vector<256x128xf32>
    tpu.vector_store %arg8[%c0_17, %c0_18], %22 {strides = array<i32>} : memref<256x128xf32, #tpu.memory_space<vmem>>, vector<256x128xf32>,
    return
  }
  func.func @transform_0(%arg0: i32) -> (i32, i32) {
    %c0_i32 = arith.constant 0 : i32
    %c0_i32_0 = arith.constant 0 : i32
    return %arg0, %c0_i32 : i32, i32
  }
  func.func @transform_1(%arg0: i32) -> (i32, i32) {
    %c0_i32 = arith.constant 0 : i32
    %c0_i32_0 = arith.constant 0 : i32
    %c0_i32_1 = arith.constant 0 : i32
    return %c0_i32, %c0_i32_0 : i32, i32
  }
  func.func @transform_2(%arg0: i32) -> (i32, i32) {
    %c0_i32 = arith.constant 0 : i32
    %c0_i32_0 = arith.constant 0 : i32
    %c0_i32_1 = arith.constant 0 : i32
    return %c0_i32, %c0_i32_0 : i32, i32
  }
  func.func @transform_3(%arg0: i32) -> (i32, i32) {
    %c0_i32 = arith.constant 0 : i32
    %c0_i32_0 = arith.constant 0 : i32
    %c0_i32_1 = arith.constant 0 : i32
    return %c0_i32, %c0_i32_0 : i32, i32
  }
  func.func @transform_4(%arg0: i32) -> (i32, i32) {
    %c0_i32 = arith.constant 0 : i32
    %c0_i32_0 = arith.constant 0 : i32
    %c0_i32_1 = arith.constant 0 : i32
    return %c0_i32, %c0_i32_0 : i32, i32
  }
  func.func @transform_5(%arg0: i32) -> (i32, i32) {
    %c0_i32 = arith.constant 0 : i32
    %c0_i32_0 = arith.constant 0 : i32
    %c0_i32_1 = arith.constant 0 : i32
    return %c0_i32, %c0_i32_0 : i32, i32
  }
  func.func @transform_6(%arg0: i32) -> (i32, i32) {
    %c0_i32 = arith.constant 0 : i32
    %c0_i32_0 = arith.constant 0 : i32
    %c0_i32_1 = arith.constant 0 : i32
    return %c0_i32, %c0_i32_0 : i32, i32
  }
  func.func @transform_7(%arg0: i32) -> (i32, i32) {
    %c0_i32 = arith.constant 0 : i32
    %c0_i32_0 = arith.constant 0 : i32
    return %arg0, %c0_i32 : i32, i32
  }
}

</mosaic_0001>

<llo_original>
// kernel: tpu_custom_call.1
$region0: #{tpu_custom_call.1}
  #allocation0 [shape = 'u32[]', space=smem, size = 0x4, offset = 0x4, fixed_abs, tag = 'smem constant byte address 0x4 - core index']
  #allocation1 [shape = 'u32[144,128]{1,0:T(1,128)}', space=vmem, size = 0x12000, scoped, tag = 'internal scratch']
  %s0 = inlined_call_operand.vmem [shape: f32[512,8], index: 0, kind: input, shape index: {}]
  %s1 = inlined_call_operand.vmem [shape: bf16[8,128], index: 1, kind: input, shape index: {}]
  %s2 = inlined_call_operand.vmem [shape: f32[1,128], index: 2, kind: input, shape index: {}]
  %s3 = inlined_call_operand.vmem [shape: bf16[128,128], index: 3, kind: input, shape index: {}]
  %s4 = inlined_call_operand.vmem [shape: f32[1,128], index: 4, kind: input, shape index: {}]
  %s5 = inlined_call_operand.vmem [shape: bf16[128,128], index: 5, kind: input, shape index: {}]
  %s6 = inlined_call_operand.vmem [shape: f32[1,128], index: 6, kind: input, shape index: {}]
  %s7 = inlined_call_operand.hbm [shape: f32[512,128], index: 7, kind: output, shape index: {}]
  %s8 = sld [smem:[#allocation0]]
  $region61: #{tpu_custom_call.1} parent=0
    _
  %s10 = ssub.s32 1, %s8
  %s11 = scalar_select 0, %s10, %s8
  $region1: #{tpu_custom_call.1} parent=0
    #allocation2 [shape = 'u8[262144]{0}', space=vmem, size = 0x40000, scoped, tag = 'output window, operand 0']
    #allocation3 [shape = 's32[2]{0}', space=sflag, size = 0x8, scoped, tag = 'scoped memory for tpu_custom_call.1']
    %12 = vsyncpa [#allocation3], 0
    %s13 = scalar_lea.sflag [#allocation3], 1
    %14 = vsyncpa %s13, 0
    loop: start=0, step=1, limit=4
    $region2: #{tpu_custom_call.1} parent=1 // loop_pre_header
      _
    $region3: #{tpu_custom_call.1} parent=1 // loop_header
      %s16 = sphi 0, %s20
      %p17 = scmp.ge.s32.totalorder %s16, 4
      %s26 = sphi 0, %s28
      %s29 = sphi 0, %s26
      %s30 = sphi 0, %s29
      %s46 = sphi 0, %s30
      %s50 = sphi 0, %s50
      %s52 = sphi 0, %s50
      %s53 = sphi 0, %s52
      %s67 = sphi 0, %s53
      %s71 = sphi 0, %s71
      %s73 = sphi 0, %s71
      %s74 = sphi 0, %s73
      %s88 = sphi 0, %s74
      %s92 = sphi 0, %s92
      %s94 = sphi 0, %s92
      %s95 = sphi 0, %s94
      %s109 = sphi 0, %s95
      %s113 = sphi 0, %s113
      %s115 = sphi 0, %s113
      %s116 = sphi 0, %s115
      %s130 = sphi 0, %s116
      %s134 = sphi 0, %s134
      %s136 = sphi 0, %s134
      %s137 = sphi 0, %s136
      %s151 = sphi 0, %s137
      %s155 = sphi 0, %s155
      %s157 = sphi 0, %s155
      %s158 = sphi 0, %s157
      %s172 = sphi 0, %s158
      %s178 = sphi 0, %s180
      %s181 = sphi 0, %s178
      %s182 = sphi 0, %s181
      %s198 = sphi 0, %s182
    $region4: #{tpu_custom_call.1} parent=1 // loop_header_branch
      %19 = sbr.rel (%p17) target = $region8
    $region5: #{tpu_custom_call.1} parent=1 // loop_body
      %s21 = ssub.s32 %s16, 1
      %s22 = ssub.s32 %s16, 2
      %s23 = sadd.s32 %s16, 1
      %s24 = ssub.s32 %s16, %s23
      %p25 = scmp.eq.s32.totalorder %s24, 0
      %s27 = sadd.s32 %s26, 1
      %s28 = scalar_select %p25, %s26, %s27
      %p31 = pneg %p25
      %p32 = scmp.eq.s32.totalorder %s16, 1
      %p33 = por %p31, %p32
      %p34 = scmp.ne.s32.totalorder %s26, %s29
      %p35 = scmp.eq.s32.totalorder %s16, 0
      %p36 = por %p34, %p35
      %p37 = scmp.ne.s32.totalorder %s26, %s29
      %p38 = scmp.eq.s32.totalorder %s21, 1
      %p39 = por %p37, %p38
      %p40 = scmp.ne.s32.totalorder %s29, %s30
      %p41 = scmp.eq.s32.totalorder %s21, 0
      %p42 = por %p40, %p41
      %p43 = scmp.ne.s32.totalorder %s29, %s30
      %p44 = scmp.eq.s32.totalorder %s22, 1
      %p45 = por %p43, %p44
      %p47 = scmp.ne.s32.totalorder %s30, %s46
      %p48 = scmp.eq.s32.totalorder %s22, 0
      %p49 = por %p47, %p48
      %s51 = sadd.s32 %s50, 1
      %p54 = scmp.eq.s32.totalorder %s16, 1
      %p55 = scmp.ne.s32.totalorder %s50, %s52
      %p56 = scmp.eq.s32.totalorder %s16, 0
      %p57 = por %p55, %p56
      %p58 = scmp.ne.s32.totalorder %s50, %s52
      %p59 = scmp.eq.s32.totalorder %s21, 1
      %p60 = por %p58, %p59
      %p61 = scmp.ne.s32.totalorder %s52, %s53
      %p62 = scmp.eq.s32.totalorder %s21, 0
      %p63 = por %p61, %p62
      %p64 = scmp.ne.s32.totalorder %s52, %s53
      %p65 = scmp.eq.s32.totalorder %s22, 1
      %p66 = por %p64, %p65
      %p68 = scmp.ne.s32.totalorder %s53, %s67
      %p69 = scmp.eq.s32.totalorder %s22, 0
      %p70 = por %p68, %p69
      %s72 = sadd.s32 %s71, 1
      %p75 = scmp.eq.s32.totalorder %s16, 1
      %p76 = scmp.ne.s32.totalorder %s71, %s73
      %p77 = scmp.eq.s32.totalorder %s16, 0
      %p78 = por %p76, %p77
      %p79 = scmp.ne.s32.totalorder %s71, %s73
      %p80 = scmp.eq.s32.totalorder %s21, 1
      %p81 = por %p79, %p80
      %p82 = scmp.ne.s32.totalorder %s73, %s74
      %p83 = scmp.eq.s32.totalorder %s21, 0
      %p84 = por %p82, %p83
      %p85 = scmp.ne.s32.totalorder %s73, %s74
      %p86 = scmp.eq.s32.totalorder %s22, 1
      %p87 = por %p85, %p86
      %p89 = scmp.ne.s32.totalorder %s74, %s88
      %p90 = scmp.eq.s32.totalorder %s22, 0
      %p91 = por %p89, %p90
      %s93 = sadd.s32 %s92, 1
      %p96 = scmp.eq.s32.totalorder %s16, 1
      %p97 = scmp.ne.s32.totalorder %s92, %s94
      %p98 = scmp.eq.s32.totalorder %s16, 0
      %p99 = por %p97, %p98
      %p100 = scmp.ne.s32.totalorder %s92, %s94
      %p101 = scmp.eq.s32.totalorder %s21, 1
      %p102 = por %p100, %p101
      %p103 = scmp.ne.s32.totalorder %s94, %s95
      %p104 = scmp.eq.s32.totalorder %s21, 0
      %p105 = por %p103, %p104
      %p106 = scmp.ne.s32.totalorder %s94, %s95
      %p107 = scmp.eq.s32.totalorder %s22, 1
      %p108 = por %p106, %p107
      %p110 = scmp.ne.s32.totalorder %s95, %s109
      %p111 = scmp.eq.s32.totalorder %s22, 0
      %p112 = por %p110, %p111
      %s114 = sadd.s32 %s113, 1
      %p117 = scmp.eq.s32.totalorder %s16, 1
      %p118 = scmp.ne.s32.totalorder %s113, %s115
      %p119 = scmp.eq.s32.totalorder %s16, 0
      %p120 = por %p118, %p119
      %p121 = scmp.ne.s32.totalorder %s113, %s115
      %p122 = scmp.eq.s32.totalorder %s21, 1
      %p123 = por %p121, %p122
      %p124 = scmp.ne.s32.totalorder %s115, %s116
      %p125 = scmp.eq.s32.totalorder %s21, 0
      %p126 = por %p124, %p125
      %p127 = scmp.ne.s32.totalorder %s115, %s116
      %p128 = scmp.eq.s32.totalorder %s22, 1
      %p129 = por %p127, %p128
      %p131 = scmp.ne.s32.totalorder %s116, %s130
      %p132 = scmp.eq.s32.totalorder %s22, 0
      %p133 = por %p131, %p132
      %s135 = sadd.s32 %s134, 1
      %p138 = scmp.eq.s32.totalorder %s16, 1
      %p139 = scmp.ne.s32.totalorder %s134, %s136
      %p140 = scmp.eq.s32.totalorder %s16, 0
      %p141 = por %p139, %p140
      %p142 = scmp.ne.s32.totalorder %s134, %s136
      %p143 = scmp.eq.s32.totalorder %s21, 1
      %p144 = por %p142, %p143
      %p145 = scmp.ne.s32.totalorder %s136, %s137
      %p146 = scmp.eq.s32.totalorder %s21, 0
      %p147 = por %p145, %p146
      %p148 = scmp.ne.s32.totalorder %s136, %s137
      %p149 = scmp.eq.s32.totalorder %s22, 1
      %p150 = por %p148, %p149
      %p152 = scmp.ne.s32.totalorder %s137, %s151
      %p153 = scmp.eq.s32.totalorder %s22, 0
      %p154 = por %p152, %p153
      %s156 = sadd.s32 %s155, 1
      %p159 = scmp.eq.s32.totalorder %s16, 1
      %p160 = scmp.ne.s32.totalorder %s155, %s157
      %p161 = scmp.eq.s32.totalorder %s16, 0
      %p162 = por %p160, %p161
      %p163 = scmp.ne.s32.totalorder %s155, %s157
      %p164 = scmp.eq.s32.totalorder %s21, 1
      %p165 = por %p163, %p164
      %p166 = scmp.ne.s32.totalorder %s157, %s158
      %p167 = scmp.eq.s32.totalorder %s21, 0
      %p168 = por %p166, %p167
      %p169 = scmp.ne.s32.totalorder %s157, %s158
      %p170 = scmp.eq.s32.totalorder %s22, 1
      %p171 = por %p169, %p170
      %p173 = scmp.ne.s32.totalorder %s158, %s172
      %p174 = scmp.eq.s32.totalorder %s22, 0
      %p175 = por %p173, %p174
      %s176 = ssub.s32 %s16, %s23
      %p177 = scmp.eq.s32.totalorder %s176, 0
      %s179 = sadd.s32 %s178, 1
      %s180 = scalar_select %p177, %s178, %s179
      %p183 = pneg %p177
      %p184 = scmp.eq.s32.totalorder %s16, 1
      %p185 = por %p183, %p184
      %p186 = scmp.ne.s32.totalorder %s178, %s181
      %p187 = scmp.eq.s32.totalorder %s16, 0
      %p188 = por %p186, %p187
      %p189 = scmp.ne.s32.totalorder %s178, %s181
      %p190 = scmp.eq.s32.totalorder %s21, 1
      %p191 = por %p189, %p190
      %p192 = scmp.ne.s32.totalorder %s181, %s182
      %p193 = scmp.eq.s32.totalorder %s21, 0
      %p194 = por %p192, %p193
      %p195 = scmp.ne.s32.totalorder %s181, %s182
      %p196 = scmp.eq.s32.totalorder %s22, 1
      %p197 = por %p195, %p196
      %p199 = scmp.ne.s32.totalorder %s182, %s198
      %p200 = scmp.eq.s32.totalorder %s22, 0
      %p201 = por %p199, %p200
      %p202 = scmp.le.s32.totalorder 1, %s16
      %p203 = scmp.lt.s32.totalorder %s16, 3
      %p204 = pnand %p202, %p203
      %p205 = pneg %p204
      // Predicated region
      $region9: #{tpu_custom_call.1} parent=5 // pred_check
        _
      $region10: #{tpu_custom_call.1} parent=5 // pred_check_branch
        %207 = sbr.rel (%p204) target = $region12
      $region11: #{tpu_custom_call.1} parent=5 // pred_region
        %s208 = ssub.s32 %s16, 1
        // Predicated region
        $region13: #{tpu_custom_call.1} parent=11 // pred_check
          %p209 = pneg %p63
        $region14: #{tpu_custom_call.1} parent=11 // pred_check_branch
          %211 = sbr.rel (%p209) target = $region16
        $region15: #{tpu_custom_call.1} parent=11 // pred_region
          _
        $region16: #{tpu_custom_call.1} parent=11 // pred_fallthru
          _
        // Predicated region
        $region17: #{tpu_custom_call.1} parent=11 // pred_check
          %p212 = pneg %p84
        $region18: #{tpu_custom_call.1} parent=11 // pred_check_branch
          %214 = sbr.rel (%p212) target = $region20
        $region19: #{tpu_custom_call.1} parent=11 // pred_region
          _
        $region20: #{tpu_custom_call.1} parent=11 // pred_fallthru
          _
        // Predicated region
        $region21: #{tpu_custom_call.1} parent=11 // pred_check
          %p215 = pneg %p105
        $region22: #{tpu_custom_call.1} parent=11 // pred_check_branch
          %217 = sbr.rel (%p215) target = $region24
        $region23: #{tpu_custom_call.1} parent=11 // pred_region
          _
        $region24: #{tpu_custom_call.1} parent=11 // pred_fallthru
          _
        // Predicated region
        $region25: #{tpu_custom_call.1} parent=11 // pred_check
          %p218 = pneg %p126
        $region26: #{tpu_custom_call.1} parent=11 // pred_check_branch
          %220 = sbr.rel (%p218) target = $region28
        $region27: #{tpu_custom_call.1} parent=11 // pred_region
          _
        $region28: #{tpu_custom_call.1} parent=11 // pred_fallthru
          _
        // Predicated region
        $region29: #{tpu_custom_call.1} parent=11 // pred_check
          %p221 = pneg %p147
        $region30: #{tpu_custom_call.1} parent=11 // pred_check_branch
          %223 = sbr.rel (%p221) target = $region32
        $region31: #{tpu_custom_call.1} parent=11 // pred_region
          _
        $region32: #{tpu_custom_call.1} parent=11 // pred_fallthru
          _
        // Predicated region
        $region33: #{tpu_custom_call.1} parent=11 // pred_check
          %p224 = pneg %p168
        $region34: #{tpu_custom_call.1} parent=11 // pred_check_branch
          %226 = sbr.rel (%p224) target = $region36
        $region35: #{tpu_custom_call.1} parent=11 // pred_region
          _
        $region36: #{tpu_custom_call.1} parent=11 // pred_fallthru
          _
      $region12: #{tpu_custom_call.1} parent=5 // pred_fallthru
        _
      %p227 = scmp.lt.s32.totalorder %s16, 2
      // Predicated region
      $region37: #{tpu_custom_call.1} parent=5 // pred_check
        %p228 = pneg %p227
      $region38: #{tpu_custom_call.1} parent=5 // pred_check_branch
        %230 = sbr.rel (%p228) target = $region40
      $region39: #{tpu_custom_call.1} parent=5 // pred_region
        // Predicated region
        $region41: #{tpu_custom_call.1} parent=39 // pred_check
          %p231 = pneg %p36
        $region42: #{tpu_custom_call.1} parent=39 // pred_check_branch
          %233 = sbr.rel (%p231) target = $region44
        $region43: #{tpu_custom_call.1} parent=39 // pred_region
          %s234 = smul.u32 32, %s16
          %p235 = scmp.lt.s32.totalorder %s234, 63
          %s236 = scalar_select %p235, %s234, 63
          %s237 = smul.addr %s236, 8
          %s238 = scalar_lea.vmem %s0, %s237
          %s239 = smul.u32 32, %s16
        $region44: #{tpu_custom_call.1} parent=39 // pred_fallthru
          _
      $region40: #{tpu_custom_call.1} parent=5 // pred_fallthru
        _
      %p240 = scmp.le.s32.totalorder 1, %s16
      %p241 = scmp.lt.s32.totalorder %s16, 3
      %p242 = pnand %p240, %p241
      %p243 = pneg %p242
      // Predicated region
      $region45: #{tpu_custom_call.1} parent=5 // pred_check
        _
      $region46: #{tpu_custom_call.1} parent=5 // pred_check_branch
        %245 = sbr.rel (%p242) target = $region48
      $region47: #{tpu_custom_call.1} parent=5 // pred_region
        %s246 = ssub.s32 %s16, 1
        %s247 = smul.u32 32, %s21
        %p248 = scmp.lt.s32.totalorder %s247, 63
        %s249 = scalar_select %p248, %s247, 63
        %s250 = smul.addr %s249, 8
        %s251 = scalar_lea.vmem %s0, %s250
        %p252 = pneg %p42
        %p253 = pneg %p39
        %p254 = pneg %p63
        %p255 = pneg %p60
        %p256 = pneg %p84
        %p257 = pneg %p81
        %p258 = pneg %p105
        %p259 = pneg %p102
        %p260 = pneg %p126
        %p261 = pneg %p123
        %p262 = pneg %p147
        %p263 = pneg %p144
        %p264 = pneg %p168
        %p265 = pneg %p165
        %p266 = pneg %p194
        %p267 = pneg %p191
        %s268 = sand.u32 %s181, 1
        %s269 = scalar_lea.sflag [#allocation3], %s268
        %s270 = sand.u32 %s181, 1
        %s271 = smul.addr %s270, 256
        %s272 = scalar_lea.vmem [#allocation2], %s271
        %s273 = smul.u32 32, %s21
        %p274 = scmp.lt.s32.totalorder %s273, 63
        %s275 = scalar_select %p274, %s273, 63
        %s276 = smul.addr %s275, 8
        %s277 = scalar_lea.vmem %s0, %s276
        %s278 = smul.u32 32, %s21
        %s279 = smul.u32 32, %s21
        %v281 = vld [vmem:[%s277] sm:$0xff]
        %v282 = vld [vmem:[%s277 + $0x8] sm:$0xff]
        %v283 = vld [vmem:[%s277 + $0x10] sm:$0xff]
        %v284 = vld [vmem:[%s277 + $0x18] sm:$0xff]
        %v285 = vld [vmem:[%s277 + $0x20] sm:$0xff]
        %v286 = vld [vmem:[%s277 + $0x28] sm:$0xff]
        %v287 = vld [vmem:[%s277 + $0x30] sm:$0xff]
        %v288 = vld [vmem:[%s277 + $0x38] sm:$0xff]
        %v289 = vld [vmem:[%s277 + $0x40] sm:$0xff]
        %v290 = vld [vmem:[%s277 + $0x48] sm:$0xff]
        %v291 = vld [vmem:[%s277 + $0x50] sm:$0xff]
        %v292 = vld [vmem:[%s277 + $0x58] sm:$0xff]
        %v293 = vld [vmem:[%s277 + $0x60] sm:$0xff]
        %v294 = vld [vmem:[%s277 + $0x68] sm:$0xff]
        %v295 = vld [vmem:[%s277 + $0x70] sm:$0xff]
        %v296 = vld [vmem:[%s277 + $0x78] sm:$0xff]
        %v297 = vld [vmem:[%s277 + $0x80] sm:$0xff]
        %v298 = vld [vmem:[%s277 + $0x88] sm:$0xff]
        %v299 = vld [vmem:[%s277 + $0x90] sm:$0xff]
        %v300 = vld [vmem:[%s277 + $0x98] sm:$0xff]
        %v301 = vld [vmem:[%s277 + $0xa0] sm:$0xff]
        %v302 = vld [vmem:[%s277 + $0xa8] sm:$0xff]
        %v303 = vld [vmem:[%s277 + $0xb0] sm:$0xff]
        %v304 = vld [vmem:[%s277 + $0xb8] sm:$0xff]
        %v305 = vld [vmem:[%s277 + $0xc0] sm:$0xff]
        %v306 = vld [vmem:[%s277 + $0xc8] sm:$0xff]
        %v307 = vld [vmem:[%s277 + $0xd0] sm:$0xff]
        %v308 = vld [vmem:[%s277 + $0xd8] sm:$0xff]
        %v309 = vld [vmem:[%s277 + $0xe0] sm:$0xff]
        %v310 = vld [vmem:[%s277 + $0xe8] sm:$0xff]
        %v311 = vld [vmem:[%s277 + $0xf0] sm:$0xff]
        %v312 = vld [vmem:[%s277 + $0xf8] sm:$0xff]
        %v313 = vld [vmem:[%s1] sm:$0xf]
        %v314 = vld [vmem:[%s2] sm:$0x1]
        %v315 = vpack.c.bf16 %v282, %v281
        %v316 = vpack.c.bf16 %v284, %v283
        %v317 = vpack.c.bf16 %v286, %v285
        %v318 = vpack.c.bf16 %v288, %v287
        %v319 = vpack.c.bf16 %v290, %v289
        %v320 = vpack.c.bf16 %v292, %v291
        %v321 = vpack.c.bf16 %v294, %v293
        %v322 = vpack.c.bf16 %v296, %v295
        %v323 = vpack.c.bf16 %v298, %v297
        %v324 = vpack.c.bf16 %v300, %v299
        %v325 = vpack.c.bf16 %v302, %v301
        %v326 = vpack.c.bf16 %v304, %v303
        %v327 = vpack.c.bf16 %v306, %v305
        %v328 = vpack.c.bf16 %v308, %v307
        %v329 = vpack.c.bf16 %v310, %v309
        %v330 = vpack.c.bf16 %v312, %v311
        %v332 = vlaneseq
        %v333 = vshrl.u32 %v332, 7
        %v334 = vsub.s32 0, %v333
        %v335 = vrot.slane %v314, %v334
        %vm337 = vcmask 64512
        %v339 = vsel %vm337, %v315, 0
        %v342 = vsel %vm337, %v316, 0
        %v345 = vsel %vm337, %v317, 0
        %v348 = vsel %vm337, %v318, 0
        %v351 = vsel %vm337, %v319, 0
        %v354 = vsel %vm337, %v320, 0
        %v357 = vsel %vm337, %v321, 0
        %v360 = vsel %vm337, %v322, 0
        %v363 = vsel %vm337, %v323, 0
        %v366 = vsel %vm337, %v324, 0
        %v369 = vsel %vm337, %v325, 0
        %v372 = vsel %vm337, %v326, 0
        %v375 = vsel %vm337, %v327, 0
        %v378 = vsel %vm337, %v328, 0
        %v381 = vsel %vm337, %v329, 0
        %v384 = vsel %vm337, %v330, 0
        %vm386 = vcmask 1043456
        %v388 = vsel %vm386, %v313, 0
        %390 = vmatprep.subr.bf16.mxu0 0
        %391 = vmatpush1.bf16.msra.mxu0 %v388
        %392 = vmatprep.subr.bf16.mxu0 0
        %393 = vmatpush1.bf16.msra.mxu0 0
        %394 = vmatprep.subr.bf16.mxu0 0
        %395 = vmatpush1.bf16.msra.mxu0 0
        %396 = vmatprep.subr.bf16.mxu0 0
        %397 = vmatpush1.bf16.msra.mxu0 0
        %398 = vmatprep.subr.bf16.mxu0 0
        %399 = vmatpush1.bf16.msra.mxu0 0
        %400 = vmatprep.subr.bf16.mxu0 0
        %401 = vmatpush1.bf16.msra.mxu0 0
        %402 = vmatprep.subr.bf16.mxu0 0
        %403 = vmatpush1.bf16.msra.mxu0 0
        %404 = vmatprep.subr.bf16.mxu0 0
        %405 = vmatpush1.bf16.msra.mxu0 0
        %406 = vmatprep.subr.bf16.mxu0 0
        %407 = vmatpush1.bf16.msra.mxu0 0
        %408 = vmatprep.subr.bf16.mxu0 0
        %409 = vmatpush1.bf16.msra.mxu0 0
        %410 = vmatprep.subr.bf16.mxu0 0
        %411 = vmatpush1.bf16.msra.mxu0 0
        %412 = vmatprep.subr.bf16.mxu0 0
        %413 = vmatpush1.bf16.msra.mxu0 0
        %414 = vmatprep.subr.bf16.mxu0 0
        %415 = vmatpush1.bf16.msra.mxu0 0
        %416 = vmatprep.subr.bf16.mxu0 0
        %417 = vmatpush1.bf16.msra.mxu0 0
        %418 = vmatprep.subr.bf16.mxu0 0
        %419 = vmatpush1.bf16.msra.mxu0 0
        %420 = vmatprep.subr.bf16.mxu0 0
        %421 = vmatpush1.bf16.msra.mxu0 0
        %422 = vmatprep.mubr.bf16.mxu0 0
        %423 = vmatmul.mubr.bf16.gmra.mrb[0].mxu0 %v339
        %v424 = vpop.f32.mrb[0].mxu0
        %v425 = vadd.f32 %v335, %v424
        %v426 = vpop.f32.mrb[0].mxu0
        %v427 = vpop.f32.mrb[0].mxu0
        %v428 = vadd.f32 %v335, %v427
        %v429 = vpop.f32.mrb[0].mxu0
        %430 = vmatprep.mubr.bf16.mxu0 0
        %431 = vmatmul.mubr.bf16.gmra.mrb[0].mxu0 %v342
        %v432 = vpop.f32.mrb[0].mxu0
        %v433 = vadd.f32 %v335, %v432
        %v434 = vpop.f32.mrb[0].mxu0
        %v435 = vpop.f32.mrb[0].mxu0
        %v436 = vadd.f32 %v335, %v435
        %v437 = vpop.f32.mrb[0].mxu0
        %438 = vmatprep.mubr.bf16.mxu0 0
        %439 = vmatmul.mubr.bf16.gmra.mrb[0].mxu0 %v345
        %v440 = vpop.f32.mrb[0].mxu0
        %v441 = vadd.f32 %v335, %v440
        %v442 = vpop.f32.mrb[0].mxu0
        %v443 = vpop.f32.mrb[0].mxu0
        %v444 = vadd.f32 %v335, %v443
        %v445 = vpop.f32.mrb[0].mxu0
        %446 = vmatprep.mubr.bf16.mxu0 0
        %447 = vmatmul.mubr.bf16.gmra.mrb[0].mxu0 %v348
        %v448 = vpop.f32.mrb[0].mxu0
        %v449 = vadd.f32 %v335, %v448
        %v450 = vpop.f32.mrb[0].mxu0
        %v451 = vpop.f32.mrb[0].mxu0
        %v452 = vadd.f32 %v335, %v451
        %v453 = vpop.f32.mrb[0].mxu0
        %454 = vmatprep.mubr.bf16.mxu0 0
        %455 = vmatmul.mubr.bf16.gmra.mrb[0].mxu0 %v351
        %v456 = vpop.f32.mrb[0].mxu0
        %v457 = vadd.f32 %v335, %v456
        %v458 = vpop.f32.mrb[0].mxu0
        %v459 = vpop.f32.mrb[0].mxu0
        %v460 = vadd.f32 %v335, %v459
        %v461 = vpop.f32.mrb[0].mxu0
        %462 = vmatprep.mubr.bf16.mxu0 0
        %463 = vmatmul.mubr.bf16.gmra.mrb[0].mxu0 %v354
        %v464 = vpop.f32.mrb[0].mxu0
        %v465 = vadd.f32 %v335, %v464
        %v466 = vpop.f32.mrb[0].mxu0
        %v467 = vpop.f32.mrb[0].mxu0
        %v468 = vadd.f32 %v335, %v467
        %v469 = vpop.f32.mrb[0].mxu0
        %470 = vmatprep.mubr.bf16.mxu0 0
        %471 = vmatmul.mubr.bf16.gmra.mrb[0].mxu0 %v357
        %v472 = vpop.f32.mrb[0].mxu0
        %v473 = vadd.f32 %v335, %v472
        %v474 = vpop.f32.mrb[0].mxu0
        %v475 = vpop.f32.mrb[0].mxu0
        %v476 = vadd.f32 %v335, %v475
        %v477 = vpop.f32.mrb[0].mxu0
        %478 = vmatprep.mubr.bf16.mxu0 0
        %479 = vmatmul.mubr.bf16.gmra.mrb[0].mxu0 %v360
        %v480 = vpop.f32.mrb[0].mxu0
        %v481 = vadd.f32 %v335, %v480
        %v482 = vpop.f32.mrb[0].mxu0
        %v483 = vpop.f32.mrb[0].mxu0
        %v484 = vadd.f32 %v335, %v483
        %v485 = vpop.f32.mrb[0].mxu0
        %486 = vmatprep.mubr.bf16.mxu0 0
        %487 = vmatmul.mubr.bf16.gmra.mrb[0].mxu0 %v363
        %v488 = vpop.f32.mrb[0].mxu0
        %v489 = vadd.f32 %v335, %v488
        %v490 = vpop.f32.mrb[0].mxu0
        %v491 = vpop.f32.mrb[0].mxu0
        %v492 = vadd.f32 %v335, %v491
        %v493 = vpop.f32.mrb[0].mxu0
        %494 = vmatprep.mubr.bf16.mxu0 0
        %495 = vmatmul.mubr.bf16.gmra.mrb[0].mxu0 %v366
        %v496 = vpop.f32.mrb[0].mxu0
        %v497 = vadd.f32 %v335, %v496
        %v498 = vpop.f32.mrb[0].mxu0
        %v499 = vpop.f32.mrb[0].mxu0
        %v500 = vadd.f32 %v335, %v499
        %v501 = vpop.f32.mrb[0].mxu0
        %502 = vmatprep.mubr.bf16.mxu0 0
        %503 = vmatmul.mubr.bf16.gmra.mrb[0].mxu0 %v369
        %v504 = vpop.f32.mrb[0].mxu0
        %v505 = vadd.f32 %v335, %v504
        %v506 = vpop.f32.mrb[0].mxu0
        %v507 = vpop.f32.mrb[0].mxu0
        %v508 = vadd.f32 %v335, %v507
        %v509 = vpop.f32.mrb[0].mxu0
        %510 = vmatprep.mubr.bf16.mxu0 0
        %511 = vmatmul.mubr.bf16.gmra.mrb[0].mxu0 %v372
        %v512 = vpop.f32.mrb[0].mxu0
        %v513 = vadd.f32 %v335, %v512
        %v514 = vpop.f32.mrb[0].mxu0
        %v515 = vpop.f32.mrb[0].mxu0
        %v516 = vadd.f32 %v335, %v515
        %v517 = vpop.f32.mrb[0].mxu0
        %518 = vmatprep.mubr.bf16.mxu0 0
        %519 = vmatmul.mubr.bf16.gmra.mrb[0].mxu0 %v375
        %v520 = vpop.f32.mrb[0].mxu0
        %v521 = vadd.f32 %v335, %v520
        %v522 = vpop.f32.mrb[0].mxu0
        %v523 = vpop.f32.mrb[0].mxu0
        %v524 = vadd.f32 %v335, %v523
        %v525 = vpop.f32.mrb[0].mxu0
        %526 = vmatprep.mubr.bf16.mxu0 0
        %527 = vmatmul.mubr.bf16.gmra.mrb[0].mxu0 %v378
        %v528 = vpop.f32.mrb[0].mxu0
        %v529 = vadd.f32 %v335, %v528
        %v530 = vpop.f32.mrb[0].mxu0
        %v531 = vpop.f32.mrb[0].mxu0
        %v532 = vadd.f32 %v335, %v531
        %v533 = vpop.f32.mrb[0].mxu0
        %534 = vmatprep.mubr.bf16.mxu0 0
        %535 = vmatmul.mubr.bf16.gmra.mrb[0].mxu0 %v381
        %v536 = vpop.f32.mrb[0].mxu0
        %v537 = vadd.f32 %v335, %v536
        %v538 = vpop.f32.mrb[0].mxu0
        %v539 = vpop.f32.mrb[0].mxu0
        %v540 = vadd.f32 %v335, %v539
        %v541 = vpop.f32.mrb[0].mxu0
        %542 = vmatprep.mubr.bf16.mxu0 0
        %543 = vmatmul.mubr.bf16.gmra.mrb[0].mxu0 %v384
        %v544 = vpop.f32.mrb[0].mxu0
        %v545 = vadd.f32 %v335, %v544
        %v546 = vpop.f32.mrb[0].mxu0
        %v547 = vpop.f32.mrb[0].mxu0
        %v548 = vadd.f32 %v335, %v547
        %v549 = vpop.f32.mrb[0].mxu0
        %550 = vdwg.mxu0
        %v551 = vmax.f32 %v425, 0.0
        %v552 = vmax.f32 %v428, 0.0
        %v553 = vmax.f32 %v433, 0.0
        %v554 = vmax.f32 %v436, 0.0
        %v555 = vmax.f32 %v441, 0.0
        %v556 = vmax.f32 %v444, 0.0
        %v557 = vmax.f32 %v449, 0.0
        %v558 = vmax.f32 %v452, 0.0
        %v559 = vmax.f32 %v457, 0.0
        %v560 = vmax.f32 %v460, 0.0
        %v561 = vmax.f32 %v465, 0.0
        %v562 = vmax.f32 %v468, 0.0
        %v563 = vmax.f32 %v473, 0.0
        %v564 = vmax.f32 %v476, 0.0
        %v565 = vmax.f32 %v481, 0.0
        %v566 = vmax.f32 %v484, 0.0
        %v567 = vmax.f32 %v489, 0.0
        %v568 = vmax.f32 %v492, 0.0
        %v569 = vmax.f32 %v497, 0.0
        %v570 = vmax.f32 %v500, 0.0
        %v571 = vmax.f32 %v505, 0.0
        %v572 = vmax.f32 %v508, 0.0
        %v573 = vmax.f32 %v513, 0.0
        %v574 = vmax.f32 %v516, 0.0
        %v575 = vmax.f32 %v521, 0.0
        %v576 = vmax.f32 %v524, 0.0
        %v577 = vmax.f32 %v529, 0.0
        %v578 = vmax.f32 %v532, 0.0
        %v579 = vmax.f32 %v537, 0.0
        %v580 = vmax.f32 %v540, 0.0
        %v581 = vmax.f32 %v545, 0.0
        %v582 = vmax.f32 %v548, 0.0
        %v583 = vld [vmem:[%s3] sm:$0xf]
        %v584 = vld [vmem:[%s3 + $0x4] sm:$0xf]
        %v585 = vld [vmem:[%s3 + $0x8] sm:$0xf]
        %v586 = vld [vmem:[%s3 + $0xc] sm:$0xf]
        %v587 = vld [vmem:[%s3 + $0x10] sm:$0xf]
        %v588 = vld [vmem:[%s3 + $0x14] sm:$0xf]
        %v589 = vld [vmem:[%s3 + $0x18] sm:$0xf]
        %v590 = vld [vmem:[%s3 + $0x1c] sm:$0xf]
        %v591 = vld [vmem:[%s3 + $0x20] sm:$0xf]
        %v592 = vld [vmem:[%s3 + $0x24] sm:$0xf]
        %v593 = vld [vmem:[%s3 + $0x28] sm:$0xf]
        %v594 = vld [vmem:[%s3 + $0x2c] sm:$0xf]
        %v595 = vld [vmem:[%s3 + $0x30] sm:$0xf]
        %v596 = vld [vmem:[%s3 + $0x34] sm:$0xf]
        %v597 = vld [vmem:[%s3 + $0x38] sm:$0xf]
        %v598 = vld [vmem:[%s3 + $0x3c] sm:$0xf]
        %v599 = vld [vmem:[%s4] sm:$0x1]
        %v600 = vpack.c.bf16 %v552, %v551
        %v601 = vpack.c.bf16 %v554, %v553
        %v602 = vpack.c.bf16 %v556, %v555
        %v603 = vpack.c.bf16 %v558, %v557
        %v604 = vpack.c.bf16 %v560, %v559
        %v605 = vpack.c.bf16 %v562, %v561
        %v606 = vpack.c.bf16 %v564, %v563
        %v607 = vpack.c.bf16 %v566, %v565
        %v608 = vpack.c.bf16 %v568, %v567
        %v609 = vpack.c.bf16 %v570, %v569
        %v610 = vpack.c.bf16 %v572, %v571
        %v611 = vpack.c.bf16 %v574, %v573
        %v612 = vpack.c.bf16 %v576, %v575
        %v613 = vpack.c.bf16 %v578, %v577
        %v614 = vpack.c.bf16 %v580, %v579
        %v615 = vpack.c.bf16 %v582, %v581
        %v617 = vlaneseq
        %v618 = vshrl.u32 %v617, 7
        %v619 = vsub.s32 0, %v618
        %v620 = vrot.slane %v599, %v619
        %v638 = vunpack.c.l.b16 %v583
        %v639 = vunpack.c.l.b16 %v584
        %v640 = vunpack.c.l.b16 %v585
        %v641 = vunpack.c.l.b16 %v586
        %v642 = vunpack.c.l.b16 %v587
        %v643 = vunpack.c.l.b16 %v588
        %v644 = vunpack.c.l.b16 %v589
        %v645 = vunpack.c.l.b16 %v590
        %v646 = vunpack.c.l.b16 %v591
        %v647 = vunpack.c.l.b16 %v592
        %v648 = vunpack.c.l.b16 %v593
        %v649 = vunpack.c.l.b16 %v594
        %v650 = vunpack.c.l.b16 %v595
        %v651 = vunpack.c.l.b16 %v596
        %v652 = vunpack.c.l.b16 %v597
        %v653 = vunpack.c.l.b16 %v598
        %v654 = vpack.c.b16 %v639, %v638
        %v655 = vpack.c.b16 %v641, %v640
        %v656 = vpack.c.b16 %v643, %v642
        %v657 = vpack.c.b16 %v645, %v644
        %v658 = vpack.c.b16 %v647, %v646
        %v659 = vpack.c.b16 %v649, %v648
        %v660 = vpack.c.b16 %v651, %v650
        %v661 = vpack.c.b16 %v653, %v652
        %670 = vmatprep.subr.bf16.mxu0 0
        %671 = vmatpush1.bf16.msra.mxu0 %v654
        %672 = vmatprep.subr.bf16.mxu0 0
        %673 = vmatpush1.bf16.msra.mxu0 %v655
        %674 = vmatprep.subr.bf16.mxu0 0
        %675 = vmatpush1.bf16.msra.mxu0 %v656
        %676 = vmatprep.subr.bf16.mxu0 0
        %677 = vmatpush1.bf16.msra.mxu0 %v657
        %678 = vmatprep.subr.bf16.mxu0 0
        %679 = vmatpush1.bf16.msra.mxu0 %v658
        %680 = vmatprep.subr.bf16.mxu0 0
        %681 = vmatpush1.bf16.msra.mxu0 %v659
        %682 = vmatprep.subr.bf16.mxu0 0
        %683 = vmatpush1.bf16.msra.mxu0 %v660
        %684 = vmatprep.subr.bf16.mxu0 0
        %685 = vmatpush1.bf16.msra.mxu0 %v661
        %686 = vmatprep.subr.bf16.mxu0 0
        %687 = vmatpush1.bf16.msra.mxu0 0
        %688 = vmatprep.subr.bf16.mxu0 0
        %689 = vmatpush1.bf16.msra.mxu0 0
        %690 = vmatprep.subr.bf16.mxu0 0
        %691 = vmatpush1.bf16.msra.mxu0 0
        %692 = vmatprep.subr.bf16.mxu0 0
        %693 = vmatpush1.bf16.msra.mxu0 0
        %694 = vmatprep.subr.bf16.mxu0 0
        %695 = vmatpush1.bf16.msra.mxu0 0
        %696 = vmatprep.subr.bf16.mxu0 0
        %697 = vmatpush1.bf16.msra.mxu0 0
        %698 = vmatprep.subr.bf16.mxu0 0
        %699 = vmatpush1.bf16.msra.mxu0 0
        %700 = vmatprep.subr.bf16.mxu0 0
        %701 = vmatpush1.bf16.msra.mxu0 0
        %702 = vmatprep.mubr.bf16.mxu0 0
        %703 = vmatmul.mubr.bf16.gmra.mrb[0].mxu0 %v600
        %v704 = vpop.f32.mrb[0].mxu0
        %v705 = vadd.f32 %v620, %v704
        %v706 = vpop.f32.mrb[0].mxu0
        %v707 = vpop.f32.mrb[0].mxu0
        %v708 = vadd.f32 %v620, %v707
        %v709 = vpop.f32.mrb[0].mxu0
        %710 = vmatprep.mubr.bf16.mxu0 0
        %711 = vmatmul.mubr.bf16.gmra.mrb[0].mxu0 %v601
        %v712 = vpop.f32.mrb[0].mxu0
        %v713 = vadd.f32 %v620, %v712
        %v714 = vpop.f32.mrb[0].mxu0
        %v715 = vpop.f32.mrb[0].mxu0
        %v716 = vadd.f32 %v620, %v715
        %v717 = vpop.f32.mrb[0].mxu0
        %718 = vmatprep.mubr.bf16.mxu0 0
        %719 = vmatmul.mubr.bf16.gmra.mrb[0].mxu0 %v602
        %v720 = vpop.f32.mrb[0].mxu0
        %v721 = vadd.f32 %v620, %v720
        %v722 = vpop.f32.mrb[0].mxu0
        %v723 = vpop.f32.mrb[0].mxu0
        %v724 = vadd.f32 %v620, %v723
        %v725 = vpop.f32.mrb[0].mxu0
        %726 = vmatprep.mubr.bf16.mxu0 0
        %727 = vmatmul.mubr.bf16.gmra.mrb[0].mxu0 %v603
        %v728 = vpop.f32.mrb[0].mxu0
        %v729 = vadd.f32 %v620, %v728
        %v730 = vpop.f32.mrb[0].mxu0
        %v731 = vpop.f32.mrb[0].mxu0
        %v732 = vadd.f32 %v620, %v731
        %v733 = vpop.f32.mrb[0].mxu0
        %734 = vmatprep.mubr.bf16.mxu0 0
        %735 = vmatmul.mubr.bf16.gmra.mrb[0].mxu0 %v604
        %v736 = vpop.f32.mrb[0].mxu0
        %v737 = vadd.f32 %v620, %v736
        %v738 = vpop.f32.mrb[0].mxu0
        %v739 = vpop.f32.mrb[0].mxu0
        %v740 = vadd.f32 %v620, %v739
        %v741 = vpop.f32.mrb[0].mxu0
        %742 = vmatprep.mubr.bf16.mxu0 0
        %743 = vmatmul.mubr.bf16.gmra.mrb[0].mxu0 %v605
        %v744 = vpop.f32.mrb[0].mxu0
        %v745 = vadd.f32 %v620, %v744
        %v746 = vpop.f32.mrb[0].mxu0
        %v747 = vpop.f32.mrb[0].mxu0
        %v748 = vadd.f32 %v620, %v747
        %v749 = vpop.f32.mrb[0].mxu0
        %750 = vmatprep.mubr.bf16.mxu0 0
        %751 = vmatmul.mubr.bf16.gmra.mrb[0].mxu0 %v606
        %v752 = vpop.f32.mrb[0].mxu0
        %v753 = vadd.f32 %v620, %v752
        %v754 = vpop.f32.mrb[0].mxu0
        %v755 = vpop.f32.mrb[0].mxu0
        %v756 = vadd.f32 %v620, %v755
        %v757 = vpop.f32.mrb[0].mxu0
        %758 = vmatprep.mubr.bf16.mxu0 0
        %759 = vmatmul.mubr.bf16.gmra.mrb[0].mxu0 %v607
        %v760 = vpop.f32.mrb[0].mxu0
        %v761 = vadd.f32 %v620, %v760
        %v762 = vpop.f32.mrb[0].mxu0
        %v763 = vpop.f32.mrb[0].mxu0
        %v764 = vadd.f32 %v620, %v763
        %v765 = vpop.f32.mrb[0].mxu0
        %766 = vmatprep.mubr.bf16.mxu0 0
        %767 = vmatmul.mubr.bf16.gmra.mrb[0].mxu0 %v608
        %v768 = vpop.f32.mrb[0].mxu0
        %v769 = vadd.f32 %v620, %v768
        %v770 = vpop.f32.mrb[0].mxu0
        %v771 = vpop.f32.mrb[0].mxu0
        %v772 = vadd.f32 %v620, %v771
        %v773 = vpop.f32.mrb[0].mxu0
        %774 = vmatprep.mubr.bf16.mxu0 0
        %775 = vmatmul.mubr.bf16.gmra.mrb[0].mxu0 %v609
        %v776 = vpop.f32.mrb[0].mxu0
        %v777 = vadd.f32 %v620, %v776
        %v778 = vpop.f32.mrb[0].mxu0
        %v779 = vpop.f32.mrb[0].mxu0
        %v780 = vadd.f32 %v620, %v779
        %v781 = vpop.f32.mrb[0].mxu0
        %782 = vmatprep.mubr.bf16.mxu0 0
        %783 = vmatmul.mubr.bf16.gmra.mrb[0].mxu0 %v610
        %v784 = vpop.f32.mrb[0].mxu0
        %v785 = vadd.f32 %v620, %v784
        %v786 = vpop.f32.mrb[0].mxu0
        %v787 = vpop.f32.mrb[0].mxu0
        %v788 = vadd.f32 %v620, %v787
        %v789 = vpop.f32.mrb[0].mxu0
        %790 = vmatprep.mubr.bf16.mxu0 0
        %791 = vmatmul.mubr.bf16.gmra.mrb[0].mxu0 %v611
        %v792 = vpop.f32.mrb[0].mxu0
        %v793 = vadd.f32 %v620, %v792
        %v794 = vpop.f32.mrb[0].mxu0
        %v795 = vpop.f32.mrb[0].mxu0
        %v796 = vadd.f32 %v620, %v795
        %v797 = vpop.f32.mrb[0].mxu0
        %798 = vmatprep.mubr.bf16.mxu0 0
        %799 = vmatmul.mubr.bf16.gmra.mrb[0].mxu0 %v612
        %v800 = vpop.f32.mrb[0].mxu0
        %v801 = vadd.f32 %v620, %v800
        %v802 = vpop.f32.mrb[0].mxu0
        %v803 = vpop.f32.mrb[0].mxu0
        %v804 = vadd.f32 %v620, %v803
        %v805 = vpop.f32.mrb[0].mxu0
        %806 = vmatprep.mubr.bf16.mxu0 0
        %807 = vmatmul.mubr.bf16.gmra.mrb[0].mxu0 %v613
        %v808 = vpop.f32.mrb[0].mxu0
        %v809 = vadd.f32 %v620, %v808
        %v810 = vpop.f32.mrb[0].mxu0
        %v811 = vpop.f32.mrb[0].mxu0
        %v812 = vadd.f32 %v620, %v811
        %v813 = vpop.f32.mrb[0].mxu0
        %814 = vmatprep.mubr.bf16.mxu0 0
        %815 = vmatmul.mubr.bf16.gmra.mrb[0].mxu0 %v614
        %v816 = vpop.f32.mrb[0].mxu0
        %v817 = vadd.f32 %v620, %v816
        %v818 = vpop.f32.mrb[0].mxu0
        %v819 = vpop.f32.mrb[0].mxu0
        %v820 = vadd.f32 %v620, %v819
        %v821 = vpop.f32.mrb[0].mxu0
        %822 = vmatprep.mubr.bf16.mxu0 0
        %823 = vmatmul.mubr.bf16.gmra.mrb[0].mxu0 %v615
        %v824 = vpop.f32.mrb[0].mxu0
        %v825 = vadd.f32 %v620, %v824
        %v826 = vpop.f32.mrb[0].mxu0
        %v827 = vpop.f32.mrb[0].mxu0
        %v828 = vadd.f32 %v620, %v827
        %v829 = vpop.f32.mrb[0].mxu0
        %830 = vdwg.mxu0
        %v831 = vmax.f32 %v705, 0.0
        %v832 = vmax.f32 %v708, 0.0
        %v833 = vmax.f32 %v713, 0.0
        %v834 = vmax.f32 %v716, 0.0
        %v835 = vmax.f32 %v721, 0.0
        %v836 = vmax.f32 %v724, 0.0
        %v837 = vmax.f32 %v729, 0.0
        %v838 = vmax.f32 %v732, 0.0
        %v839 = vmax.f32 %v737, 0.0
        %v840 = vmax.f32 %v740, 0.0
        %v841 = vmax.f32 %v745, 0.0
        %v842 = vmax.f32 %v748, 0.0
        %v843 = vmax.f32 %v753, 0.0
        %v844 = vmax.f32 %v756, 0.0
        %v845 = vmax.f32 %v761, 0.0
        %v846 = vmax.f32 %v764, 0.0
        %v847 = vmax.f32 %v769, 0.0
        %v848 = vmax.f32 %v772, 0.0
        %v849 = vmax.f32 %v777, 0.0
        %v850 = vmax.f32 %v780, 0.0
        %v851 = vmax.f32 %v785, 0.0
        %v852 = vmax.f32 %v788, 0.0
        %v853 = vmax.f32 %v793, 0.0
        %v854 = vmax.f32 %v796, 0.0
        %v855 = vmax.f32 %v801, 0.0
        %v856 = vmax.f32 %v804, 0.0
        %v857 = vmax.f32 %v809, 0.0
        %v858 = vmax.f32 %v812, 0.0
        %v859 = vmax.f32 %v817, 0.0
        %v860 = vmax.f32 %v820, 0.0
        %v861 = vmax.f32 %v825, 0.0
        %v862 = vmax.f32 %v828, 0.0
        %v863 = vld [vmem:[%s5] sm:$0xf]
        %v864 = vld [vmem:[%s5 + $0x4] sm:$0xf]
        %v865 = vld [vmem:[%s5 + $0x8] sm:$0xf]
        %v866 = vld [vmem:[%s5 + $0xc] sm:$0xf]
        %v867 = vld [vmem:[%s5 + $0x10] sm:$0xf]
        %v868 = vld [vmem:[%s5 + $0x14] sm:$0xf]
        %v869 = vld [vmem:[%s5 + $0x18] sm:$0xf]
        %v870 = vld [vmem:[%s5 + $0x1c] sm:$0xf]
        %v871 = vld [vmem:[%s5 + $0x20] sm:$0xf]
        %v872 = vld [vmem:[%s5 + $0x24] sm:$0xf]
        %v873 = vld [vmem:[%s5 + $0x28] sm:$0xf]
        %v874 = vld [vmem:[%s5 + $0x2c] sm:$0xf]
        %v875 = vld [vmem:[%s5 + $0x30] sm:$0xf]
        %v876 = vld [vmem:[%s5 + $0x34] sm:$0xf]
        %v877 = vld [vmem:[%s5 + $0x38] sm:$0xf]
        %v878 = vld [vmem:[%s5 + $0x3c] sm:$0xf]
        %v879 = vld [vmem:[%s6] sm:$0x1]
        %v880 = vpack.c.bf16 %v832, %v831
        %v881 = vpack.c.bf16 %v834, %v833
        %v882 = vpack.c.bf16 %v836, %v835
        %v883 = vpack.c.bf16 %v838, %v837
        %v884 = vpack.c.bf16 %v840, %v839
        %v885 = vpack.c.bf16 %v842, %v841
        %v886 = vpack.c.bf16 %v844, %v843
        %v887 = vpack.c.bf16 %v846, %v845
        %v888 = vpack.c.bf16 %v848, %v847
        %v889 = vpack.c.bf16 %v850, %v849
        %v890 = vpack.c.bf16 %v852, %v851
        %v891 = vpack.c.bf16 %v854, %v853
        %v892 = vpack.c.bf16 %v856, %v855
        %v893 = vpack.c.bf16 %v858, %v857
        %v894 = vpack.c.bf16 %v860, %v859
        %v895 = vpack.c.bf16 %v862, %v861
        %v897 = vlaneseq
        %v898 = vshrl.u32 %v897, 7
        %v899 = vsub.s32 0, %v898
        %v900 = vrot.slane %v879, %v899
        %v918 = vunpack.c.l.b16 %v863
        %v919 = vunpack.c.l.b16 %v864
        %v920 = vunpack.c.l.b16 %v865
        %v921 = vunpack.c.l.b16 %v866
        %v922 = vunpack.c.l.b16 %v867
        %v923 = vunpack.c.l.b16 %v868
        %v924 = vunpack.c.l.b16 %v869
        %v925 = vunpack.c.l.b16 %v870
        %v926 = vunpack.c.l.b16 %v871
        %v927 = vunpack.c.l.b16 %v872
        %v928 = vunpack.c.l.b16 %v873
        %v929 = vunpack.c.l.b16 %v874
        %v930 = vunpack.c.l.b16 %v875
        %v931 = vunpack.c.l.b16 %v876
        %v932 = vunpack.c.l.b16 %v877
        %v933 = vunpack.c.l.b16 %v878
        %v934 = vpack.c.b16 %v919, %v918
        %v935 = vpack.c.b16 %v921, %v920
        %v936 = vpack.c.b16 %v923, %v922
        %v937 = vpack.c.b16 %v925, %v924
        %v938 = vpack.c.b16 %v927, %v926
        %v939 = vpack.c.b16 %v929, %v928
        %v940 = vpack.c.b16 %v931, %v930
        %v941 = vpack.c.b16 %v933, %v932
        %950 = vmatprep.subr.bf16.mxu0 0
        %951 = vmatpush1.bf16.msra.mxu0 %v934
        %952 = vmatprep.subr.bf16.mxu0 0
        %953 = vmatpush1.bf16.msra.mxu0 %v935
        %954 = vmatprep.subr.bf16.mxu0 0
        %955 = vmatpush1.bf16.msra.mxu0 %v936
        %956 = vmatprep.subr.bf16.mxu0 0
        %957 = vmatpush1.bf16.msra.mxu0 %v937
        %958 = vmatprep.subr.bf16.mxu0 0
        %959 = vmatpush1.bf16.msra.mxu0 %v938
        %960 = vmatprep.subr.bf16.mxu0 0
        %961 = vmatpush1.bf16.msra.mxu0 %v939
        %962 = vmatprep.subr.bf16.mxu0 0
        %963 = vmatpush1.bf16.msra.mxu0 %v940
        %964 = vmatprep.subr.bf16.mxu0 0
        %965 = vmatpush1.bf16.msra.mxu0 %v941
        %966 = vmatprep.subr.bf16.mxu0 0
        %967 = vmatpush1.bf16.msra.mxu0 0
        %968 = vmatprep.subr.bf16.mxu0 0
        %969 = vmatpush1.bf16.msra.mxu0 0
        %970 = vmatprep.subr.bf16.mxu0 0
        %971 = vmatpush1.bf16.msra.mxu0 0
        %972 = vmatprep.subr.bf16.mxu0 0
        %973 = vmatpush1.bf16.msra.mxu0 0
        %974 = vmatprep.subr.bf16.mxu0 0
        %975 = vmatpush1.bf16.msra.mxu0 0
        %976 = vmatprep.subr.bf16.mxu0 0
        %977 = vmatpush1.bf16.msra.mxu0 0
        %978 = vmatprep.subr.bf16.mxu0 0
        %979 = vmatpush1.bf16.msra.mxu0 0
        %980 = vmatprep.subr.bf16.mxu0 0
        %981 = vmatpush1.bf16.msra.mxu0 0
        %982 = vmatprep.mubr.bf16.mxu0 0
        %983 = vmatmul.mubr.bf16.gmra.mrb[0].mxu0 %v880
        %v984 = vpop.f32.mrb[0].mxu0
        %v985 = vadd.f32 %v900, %v984
        %v986 = vpop.f32.mrb[0].mxu0
        %v987 = vpop.f32.mrb[0].mxu0
        %v988 = vadd.f32 %v900, %v987
        %v989 = vpop.f32.mrb[0].mxu0
        %990 = vmatprep.mubr.bf16.mxu0 0
        %991 = vmatmul.mubr.bf16.gmra.mrb[0].mxu0 %v881
        %v992 = vpop.f32.mrb[0].mxu0
        %v993 = vadd.f32 %v900, %v992
        %v994 = vpop.f32.mrb[0].mxu0
        %v995 = vpop.f32.mrb[0].mxu0
        %v996 = vadd.f32 %v900, %v995
        %v997 = vpop.f32.mrb[0].mxu0
        %998 = vmatprep.mubr.bf16.mxu0 0
        %999 = vmatmul.mubr.bf16.gmra.mrb[0].mxu0 %v882
        %v1000 = vpop.f32.mrb[0].mxu0
        %v1001 = vadd.f32 %v900, %v1000
        %v1002 = vpop.f32.mrb[0].mxu0
        %v1003 = vpop.f32.mrb[0].mxu0
        %v1004 = vadd.f32 %v900, %v1003
        %v1005 = vpop.f32.mrb[0].mxu0
        %1006 = vmatprep.mubr.bf16.mxu0 0
        %1007 = vmatmul.mubr.bf16.gmra.mrb[0].mxu0 %v883
        %v1008 = vpop.f32.mrb[0].mxu0
        %v1009 = vadd.f32 %v900, %v1008
        %v1010 = vpop.f32.mrb[0].mxu0
        %v1011 = vpop.f32.mrb[0].mxu0
        %v1012 = vadd.f32 %v900, %v1011
        %v1013 = vpop.f32.mrb[0].mxu0
        %1014 = vmatprep.mubr.bf16.mxu0 0
        %1015 = vmatmul.mubr.bf16.gmra.mrb[0].mxu0 %v884
        %v1016 = vpop.f32.mrb[0].mxu0
        %v1017 = vadd.f32 %v900, %v1016
        %v1018 = vpop.f32.mrb[0].mxu0
        %v1019 = vpop.f32.mrb[0].mxu0
        %v1020 = vadd.f32 %v900, %v1019
        %v1021 = vpop.f32.mrb[0].mxu0
        %1022 = vmatprep.mubr.bf16.mxu0 0
        %1023 = vmatmul.mubr.bf16.gmra.mrb[0].mxu0 %v885
        %v1024 = vpop.f32.mrb[0].mxu0
        %v1025 = vadd.f32 %v900, %v1024
        %v1026 = vpop.f32.mrb[0].mxu0
        %v1027 = vpop.f32.mrb[0].mxu0
        %v1028 = vadd.f32 %v900, %v1027
        %v1029 = vpop.f32.mrb[0].mxu0
        %1030 = vmatprep.mubr.bf16.mxu0 0
        %1031 = vmatmul.mubr.bf16.gmra.mrb[0].mxu0 %v886
        %v1032 = vpop.f32.mrb[0].mxu0
        %v1033 = vadd.f32 %v900, %v1032
        %v1034 = vpop.f32.mrb[0].mxu0
        %v1035 = vpop.f32.mrb[0].mxu0
        %v1036 = vadd.f32 %v900, %v1035
        %v1037 = vpop.f32.mrb[0].mxu0
        %1038 = vmatprep.mubr.bf16.mxu0 0
        %1039 = vmatmul.mubr.bf16.gmra.mrb[0].mxu0 %v887
        %v1040 = vpop.f32.mrb[0].mxu0
        %v1041 = vadd.f32 %v900, %v1040
        %v1042 = vpop.f32.mrb[0].mxu0
        %v1043 = vpop.f32.mrb[0].mxu0
        %v1044 = vadd.f32 %v900, %v1043
        %v1045 = vpop.f32.mrb[0].mxu0
        %1046 = vmatprep.mubr.bf16.mxu0 0
        %1047 = vmatmul.mubr.bf16.gmra.mrb[0].mxu0 %v888
        %v1048 = vpop.f32.mrb[0].mxu0
        %v1049 = vadd.f32 %v900, %v1048
        %v1050 = vpop.f32.mrb[0].mxu0
        %v1051 = vpop.f32.mrb[0].mxu0
        %v1052 = vadd.f32 %v900, %v1051
        %v1053 = vpop.f32.mrb[0].mxu0
        %1054 = vmatprep.mubr.bf16.mxu0 0
        %1055 = vmatmul.mubr.bf16.gmra.mrb[0].mxu0 %v889
        %v1056 = vpop.f32.mrb[0].mxu0
        %v1057 = vadd.f32 %v900, %v1056
        %v1058 = vpop.f32.mrb[0].mxu0
        %v1059 = vpop.f32.mrb[0].mxu0
        %v1060 = vadd.f32 %v900, %v1059
        %v1061 = vpop.f32.mrb[0].mxu0
        %1062 = vmatprep.mubr.bf16.mxu0 0
        %1063 = vmatmul.mubr.bf16.gmra.mrb[0].mxu0 %v890
        %v1064 = vpop.f32.mrb[0].mxu0
        %v1065 = vadd.f32 %v900, %v1064
        %v1066 = vpop.f32.mrb[0].mxu0
        %v1067 = vpop.f32.mrb[0].mxu0
        %v1068 = vadd.f32 %v900, %v1067
        %v1069 = vpop.f32.mrb[0].mxu0
        %1070 = vmatprep.mubr.bf16.mxu0 0
        %1071 = vmatmul.mubr.bf16.gmra.mrb[0].mxu0 %v891
        %v1072 = vpop.f32.mrb[0].mxu0
        %v1073 = vadd.f32 %v900, %v1072
        %v1074 = vpop.f32.mrb[0].mxu0
        %v1075 = vpop.f32.mrb[0].mxu0
        %v1076 = vadd.f32 %v900, %v1075
        %v1077 = vpop.f32.mrb[0].mxu0
        %1078 = vmatprep.mubr.bf16.mxu0 0
        %1079 = vmatmul.mubr.bf16.gmra.mrb[0].mxu0 %v892
        %v1080 = vpop.f32.mrb[0].mxu0
        %v1081 = vadd.f32 %v900, %v1080
        %v1082 = vpop.f32.mrb[0].mxu0
        %v1083 = vpop.f32.mrb[0].mxu0
        %v1084 = vadd.f32 %v900, %v1083
        %v1085 = vpop.f32.mrb[0].mxu0
        %1086 = vmatprep.mubr.bf16.mxu0 0
        %1087 = vmatmul.mubr.bf16.gmra.mrb[0].mxu0 %v893
        %v1088 = vpop.f32.mrb[0].mxu0
        %v1089 = vadd.f32 %v900, %v1088
        %v1090 = vpop.f32.mrb[0].mxu0
        %v1091 = vpop.f32.mrb[0].mxu0
        %v1092 = vadd.f32 %v900, %v1091
        %v1093 = vpop.f32.mrb[0].mxu0
        %1094 = vmatprep.mubr.bf16.mxu0 0
        %1095 = vmatmul.mubr.bf16.gmra.mrb[0].mxu0 %v894
        %v1096 = vpop.f32.mrb[0].mxu0
        %v1097 = vadd.f32 %v900, %v1096
        %v1098 = vpop.f32.mrb[0].mxu0
        %v1099 = vpop.f32.mrb[0].mxu0
        %v1100 = vadd.f32 %v900, %v1099
        %v1101 = vpop.f32.mrb[0].mxu0
        %1102 = vmatprep.mubr.bf16.mxu0 0
        %1103 = vmatmul.mubr.bf16.gmra.mrb[0].mxu0 %v895
        %v1104 = vpop.f32.mrb[0].mxu0
        %v1105 = vadd.f32 %v900, %v1104
        %v1106 = vpop.f32.mrb[0].mxu0
        %v1107 = vpop.f32.mrb[0].mxu0
        %v1108 = vadd.f32 %v900, %v1107
        %v1109 = vpop.f32.mrb[0].mxu0
        %1110 = vdwg.mxu0
        %1111 = vst [vmem:[%s272] sm:$0xff] %v985
        %1112 = vst [vmem:[%s272 + $0x8] sm:$0xff] %v988
        %1113 = vst [vmem:[%s272 + $0x10] sm:$0xff] %v993
        %1114 = vst [vmem:[%s272 + $0x18] sm:$0xff] %v996
        %1115 = vst [vmem:[%s272 + $0x20] sm:$0xff] %v1001
        %1116 = vst [vmem:[%s272 + $0x28] sm:$0xff] %v1004
        %1117 = vst [vmem:[%s272 + $0x30] sm:$0xff] %v1009
        %1118 = vst [vmem:[%s272 + $0x38] sm:$0xff] %v1012
        %1119 = vst [vmem:[%s272 + $0x40] sm:$0xff] %v1017
        %1120 = vst [vmem:[%s272 + $0x48] sm:$0xff] %v1020
        %1121 = vst [vmem:[%s272 + $0x50] sm:$0xff] %v1025
        %1122 = vst [vmem:[%s272 + $0x58] sm:$0xff] %v1028
        %1123 = vst [vmem:[%s272 + $0x60] sm:$0xff] %v1033
        %1124 = vst [vmem:[%s272 + $0x68] sm:$0xff] %v1036
        %1125 = vst [vmem:[%s272 + $0x70] sm:$0xff] %v1041
        %1126 = vst [vmem:[%s272 + $0x78] sm:$0xff] %v1044
        %1127 = vst [vmem:[%s272 + $0x80] sm:$0xff] %v1049
        %1128 = vst [vmem:[%s272 + $0x88] sm:$0xff] %v1052
        %1129 = vst [vmem:[%s272 + $0x90] sm:$0xff] %v1057
        %1130 = vst [vmem:[%s272 + $0x98] sm:$0xff] %v1060
        %1131 = vst [vmem:[%s272 + $0xa0] sm:$0xff] %v1065
        %1132 = vst [vmem:[%s272 + $0xa8] sm:$0xff] %v1068
        %1133 = vst [vmem:[%s272 + $0xb0] sm:$0xff] %v1073
        %1134 = vst [vmem:[%s272 + $0xb8] sm:$0xff] %v1076
        %1135 = vst [vmem:[%s272 + $0xc0] sm:$0xff] %v1081
        %1136 = vst [vmem:[%s272 + $0xc8] sm:$0xff] %v1084
        %1137 = vst [vmem:[%s272 + $0xd0] sm:$0xff] %v1089
        %1138 = vst [vmem:[%s272 + $0xd8] sm:$0xff] %v1092
        %1139 = vst [vmem:[%s272 + $0xe0] sm:$0xff] %v1097
        %1140 = vst [vmem:[%s272 + $0xe8] sm:$0xff] %v1100
        %1141 = vst [vmem:[%s272 + $0xf0] sm:$0xff] %v1105
        %1142 = vst [vmem:[%s272 + $0xf8] sm:$0xff] %v1108
        %s1143 = sand.u32 %s181, 1
        %s1144 = scalar_lea.sflag [#allocation3], %s1143
        %s1145 = sand.u32 %s181, 1
        %s1146 = smul.addr %s1145, 256
        %s1147 = scalar_lea.vmem [#allocation2], %s1146
        // Predicated region
        $region49: #{tpu_custom_call.1} parent=47 // pred_check
          %p1148 = pneg %p191
        $region50: #{tpu_custom_call.1} parent=47 // pred_check_branch
          %1150 = sbr.rel (%p1148) target = $region52
        $region51: #{tpu_custom_call.1} parent=47 // pred_region
          %s1151 = smul.u32 32, %s21
          %s1153 = ssub.s32 4096, 4096
          %1154 = vsyncadd %s1144, %s1153
          %s1155 = smul.addr %s1151, 128
          %s1156 = scalar_lea.hbm %s7, %s1155
          %s1157 = sshll.u32 %s1147, 4
          %s1158 = int_to_ptr.vmem [resolvable:$true] %s1157
          %1163 = dma.vmem_to_hbm [thread:$0]  %s1158, 4096, %s1156, %s1144, 128, 128, 8
        $region52: #{tpu_custom_call.1} parent=47 // pred_fallthru
          _
      $region48: #{tpu_custom_call.1} parent=5 // pred_fallthru
        _
      %p1164 = scmp.le.s32.totalorder 2, %s16
      // Predicated region
      $region53: #{tpu_custom_call.1} parent=5 // pred_check
        %p1165 = pneg %p1164
      $region54: #{tpu_custom_call.1} parent=5 // pred_check_branch
        %1167 = sbr.rel (%p1165) target = $region56
      $region55: #{tpu_custom_call.1} parent=5 // pred_region
        %s1168 = ssub.s32 %s16, 2
        // Predicated region
        $region57: #{tpu_custom_call.1} parent=55 // pred_check
          %p1169 = pneg %p197
        $region58: #{tpu_custom_call.1} parent=55 // pred_check_branch
          %1171 = sbr.rel (%p1169) target = $region60
        $region59: #{tpu_custom_call.1} parent=55 // pred_region
          %s1172 = sand.u32 %s182, 1
          %s1173 = scalar_lea.sflag [#allocation3], %s1172
          %s1174 = sand.u32 %s182, 1
          %s1175 = smul.addr %s1174, 256
          %s1176 = scalar_lea.vmem [#allocation2], %s1175
          %1177 = dma.done %s1173, 4096
        $region60: #{tpu_custom_call.1} parent=55 // pred_fallthru
          _
      $region56: #{tpu_custom_call.1} parent=5 // pred_fallthru
        _
    $region6: #{tpu_custom_call.1} parent=1 // loop_footer
      %s20 = sadd.s32 1, %s16
    $region7: #{tpu_custom_call.1} parent=1 // loop_footer_branch
      %15 = sbr.rel target = $region3
    $region8: #{tpu_custom_call.1} parent=1 // loop_exit
      _
    %1178 = vsyncpa [#allocation3], 1
    %s1179 = scalar_lea.sflag [#allocation3], 1
    %1180 = vsyncpa %s1179, 1

// kernel: tpu_custom_call.1
$region0: #{tpu_custom_call.1}
  #allocation0 [shape = 'u32[]', space=smem, size = 0x4, offset = 0x4, fixed_abs, tag = 'smem constant byte address 0x4 - core index']
  #allocation1 [shape = 'u32[144,128]{1,0:T(1,128)}', space=vmem, size = 0x12000, scoped, tag = 'internal scratch']
  %s0 = inlined_call_operand.vmem [shape: f32[512,8], index: 0, kind: input, shape index: {}]
  %s1 = inlined_call_operand.vmem [shape: bf16[8,128], index: 1, kind: input, shape index: {}]
  %s2 = inlined_call_operand.vmem [shape: f32[1,128], index: 2, kind: input, shape index: {}]
  %s3 = inlined_call_operand.vmem [shape: bf16[128,128], index: 3, kind: input, shape index: {}]
  %s4 = inlined_call_operand.vmem [shape: f32[1,128], index: 4, kind: input, shape index: {}]
  %s5 = inlined_call_operand.vmem [shape: bf16[128,128], index: 5, kind: input, shape index: {}]
  %s6 = inlined_call_operand.vmem [shape: f32[1,128], index: 6, kind: input, shape index: {}]
  %s7 = inlined_call_operand.hbm [shape: f32[512,128], index: 7, kind: output, shape index: {}]
  %s8 = sld [smem:[#allocation0]]
  $region61: #{tpu_custom_call.1} parent=0
    _
  %s10 = ssub.s32 1, %s8
  %s11 = scalar_select 0, %s10, %s8
  $region1: #{tpu_custom_call.1} parent=0
    #allocation2 [shape = 'u8[262144]{0}', space=vmem, size = 0x40000, scoped, tag = 'output window, operand 0']
    #allocation3 [shape = 's32[2]{0}', space=sflag, size = 0x8, scoped, tag = 'scoped memory for tpu_custom_call.1']
    %12 = vsyncpa [#allocation3], 0
    %s13 = scalar_lea.sflag [#allocation3], 1
    %14 = vsyncpa %s13, 0
    loop: start=0, step=1, limit=4
    $region2: #{tpu_custom_call.1} parent=1 // loop_pre_header
      _
    $region3: #{tpu_custom_call.1} parent=1 // loop_header
      %s16 = sphi 0, %s20
      %p17 = scmp.ge.s32.totalorder %s16, 4
      %s26 = sphi 0, %s28
      %s29 = sphi 0, %s26
      %s30 = sphi 0, %s29
      %s46 = sphi 0, %s30
      %s50 = sphi 0, %s50
      %s52 = sphi 0, %s50
      %s53 = sphi 0, %s52
      %s67 = sphi 0, %s53
      %s71 = sphi 0, %s71
      %s73 = sphi 0, %s71
      %s74 = sphi 0, %s73
      %s88 = sphi 0, %s74
      %s92 = sphi 0, %s92
      %s94 = sphi 0, %s92
      %s95 = sphi 0, %s94
      %s109 = sphi 0, %s95
      %s113 = sphi 0, %s113
      %s115 = sphi 0, %s113
      %s116 = sphi 0, %s115
      %s130 = sphi 0, %s116
      %s134 = sphi 0, %s134
      %s136 = sphi 0, %s134
      %s137 = sphi 0, %s136
      %s151 = sphi 0, %s137
      %s155 = sphi 0, %s155
      %s157 = sphi 0, %s155
      %s158 = sphi 0, %s157
      %s172 = sphi 0, %s158
      %s178 = sphi 0, %s180
      %s181 = sphi 0, %s178
      %s182 = sphi 0, %s181
      %s198 = sphi 0, %s182
    $region4: #{tpu_custom_call.1} parent=1 // loop_header_branch
      %19 = sbr.rel (%p17) target = $region8
    $region5: #{tpu_custom_call.1} parent=1 // loop_body
      %s21 = ssub.s32 %s16, 1
      %s22 = ssub.s32 %s16, 2
      %s23 = sadd.s32 %s16, 1
      %s24 = ssub.s32 %s16, %s23
      %p25 = scmp.eq.s32.totalorder %s24, 0
      %s27 = sadd.s32 %s26, 1
      %s28 = scalar_select %p25, %s26, %s27
      %p31 = pneg %p25
      %p32 = scmp.eq.s32.totalorder %s16, 1
      %p33 = por %p31, %p32
      %p34 = scmp.ne.s32.totalorder %s26, %s29
      %p35 = scmp.eq.s32.totalorder %s16, 0
      %p36 = por %p34, %p35
      %p37 = scmp.ne.s32.totalorder %s26, %s29
      %p38 = scmp.eq.s32.totalorder %s21, 1
      %p39 = por %p37, %p38
      %p40 = scmp.ne.s32.totalorder %s29, %s30
      %p41 = scmp.eq.s32.totalorder %s21, 0
      %p42 = por %p40, %p41
      %p43 = scmp.ne.s32.totalorder %s29, %s30
      %p44 = scmp.eq.s32.totalorder %s22, 1
      %p45 = por %p43, %p44
      %p47 = scmp.ne.s32.totalorder %s30, %s46
      %p48 = scmp.eq.s32.totalorder %s22, 0
      %p49 = por %p47, %p48
      %s51 = sadd.s32 %s50, 1
      %p54 = scmp.eq.s32.totalorder %s16, 1
      %p55 = scmp.ne.s32.totalorder %s50, %s52
      %p56 = scmp.eq.s32.totalorder %s16, 0
      %p57 = por %p55, %p56
      %p58 = scmp.ne.s32.totalorder %s50, %s52
      %p59 = scmp.eq.s32.totalorder %s21, 1
      %p60 = por %p58, %p59
      %p61 = scmp.ne.s32.totalorder %s52, %s53
      %p62 = scmp.eq.s32.totalorder %s21, 0
      %p63 = por %p61, %p62
      %p64 = scmp.ne.s32.totalorder %s52, %s53
      %p65 = scmp.eq.s32.totalorder %s22, 1
      %p66 = por %p64, %p65
      %p68 = scmp.ne.s32.totalorder %s53, %s67
      %p69 = scmp.eq.s32.totalorder %s22, 0
      %p70 = por %p68, %p69
      %s72 = sadd.s32 %s71, 1
      %p75 = scmp.eq.s32.totalorder %s16, 1
      %p76 = scmp.ne.s32.totalorder %s71, %s73
      %p77 = scmp.eq.s32.totalorder %s16, 0
      %p78 = por %p76, %p77
      %p79 = scmp.ne.s32.totalorder %s71, %s73
      %p80 = scmp.eq.s32.totalorder %s21, 1
      %p81 = por %p79, %p80
      %p82 = scmp.ne.s32.totalorder %s73, %s74
      %p83 = scmp.eq.s32.totalorder %s21, 0
      %p84 = por %p82, %p83
      %p85 = scmp.ne.s32.totalorder %s73, %s74
      %p86 = scmp.eq.s32.totalorder %s22, 1
      %p87 = por %p85, %p86
      %p89 = scmp.ne.s32.totalorder %s74, %s88
      %p90 = scmp.eq.s32.totalorder %s22, 0
      %p91 = por %p89, %p90
      %s93 = sadd.s32 %s92, 1
      %p96 = scmp.eq.s32.totalorder %s16, 1
      %p97 = scmp.ne.s32.totalorder %s92, %s94
      %p98 = scmp.eq.s32.totalorder %s16, 0
      %p99 = por %p97, %p98
      %p100 = scmp.ne.s32.totalorder %s92, %s94
      %p101 = scmp.eq.s32.totalorder %s21, 1
      %p102 = por %p100, %p101
      %p103 = scmp.ne.s32.totalorder %s94, %s95
      %p104 = scmp.eq.s32.totalorder %s21, 0
      %p105 = por %p103, %p104
      %p106 = scmp.ne.s32.totalorder %s94, %s95
      %p107 = scmp.eq.s32.totalorder %s22, 1
      %p108 = por %p106, %p107
      %p110 = scmp.ne.s32.totalorder %s95, %s109
      %p111 = scmp.eq.s32.totalorder %s22, 0
      %p112 = por %p110, %p111
      %s114 = sadd.s32 %s113, 1
      %p117 = scmp.eq.s32.totalorder %s16, 1
      %p118 = scmp.ne.s32.totalorder %s113, %s115
      %p119 = scmp.eq.s32.totalorder %s16, 0
      %p120 = por %p118, %p119
      %p121 = scmp.ne.s32.totalorder %s113, %s115
      %p122 = scmp.eq.s32.totalorder %s21, 1
      %p123 = por %p121, %p122
      %p124 = scmp.ne.s32.totalorder %s115, %s116
      %p125 = scmp.eq.s32.totalorder %s21, 0
      %p126 = por %p124, %p125
      %p127 = scmp.ne.s32.totalorder %s115, %s116
      %p128 = scmp.eq.s32.totalorder %s22, 1
      %p129 = por %p127, %p128
      %p131 = scmp.ne.s32.totalorder %s116, %s130
      %p132 = scmp.eq.s32.totalorder %s22, 0
      %p133 = por %p131, %p132
      %s135 = sadd.s32 %s134, 1
      %p138 = scmp.eq.s32.totalorder %s16, 1
      %p139 = scmp.ne.s32.totalorder %s134, %s136
      %p140 = scmp.eq.s32.totalorder %s16, 0
      %p141 = por %p139, %p140
      %p142 = scmp.ne.s32.totalorder %s134, %s136
      %p143 = scmp.eq.s32.totalorder %s21, 1
      %p144 = por %p142, %p143
      %p145 = scmp.ne.s32.totalorder %s136, %s137
      %p146 = scmp.eq.s32.totalorder %s21, 0
      %p147 = por %p145, %p146
      %p148 = scmp.ne.s32.totalorder %s136, %s137
      %p149 = scmp.eq.s32.totalorder %s22, 1
      %p150 = por %p148, %p149
      %p152 = scmp.ne.s32.totalorder %s137, %s151
      %p153 = scmp.eq.s32.totalorder %s22, 0
      %p154 = por %p152, %p153
      %s156 = sadd.s32 %s155, 1
      %p159 = scmp.eq.s32.totalorder %s16, 1
      %p160 = scmp.ne.s32.totalorder %s155, %s157
      %p161 = scmp.eq.s32.totalorder %s16, 0
      %p162 = por %p160, %p161
      %p163 = scmp.ne.s32.totalorder %s155, %s157
      %p164 = scmp.eq.s32.totalorder %s21, 1
      %p165 = por %p163, %p164
      %p166 = scmp.ne.s32.totalorder %s157, %s158
      %p167 = scmp.eq.s32.totalorder %s21, 0
      %p168 = por %p166, %p167
      %p169 = scmp.ne.s32.totalorder %s157, %s158
      %p170 = scmp.eq.s32.totalorder %s22, 1
      %p171 = por %p169, %p170
      %p173 = scmp.ne.s32.totalorder %s158, %s172
      %p174 = scmp.eq.s32.totalorder %s22, 0
      %p175 = por %p173, %p174
      %s176 = ssub.s32 %s16, %s23
      %p177 = scmp.eq.s32.totalorder %s176, 0
      %s179 = sadd.s32 %s178, 1
      %s180 = scalar_select %p177, %s178, %s179
      %p183 = pneg %p177
      %p184 = scmp.eq.s32.totalorder %s16, 1
      %p185 = por %p183, %p184
      %p186 = scmp.ne.s32.totalorder %s178, %s181
      %p187 = scmp.eq.s32.totalorder %s16, 0
      %p188 = por %p186, %p187
      %p189 = scmp.ne.s32.totalorder %s178, %s181
      %p190 = scmp.eq.s32.totalorder %s21, 1
      %p191 = por %p189, %p190
      %p192 = scmp.ne.s32.totalorder %s181, %s182
      %p193 = scmp.eq.s32.totalorder %s21, 0
      %p194 = por %p192, %p193
      %p195 = scmp.ne.s32.totalorder %s181, %s182
      %p196 = scmp.eq.s32.totalorder %s22, 1
      %p197 = por %p195, %p196
      %p199 = scmp.ne.s32.totalorder %s182, %s198
      %p200 = scmp.eq.s32.totalorder %s22, 0
      %p201 = por %p199, %p200
      %p202 = scmp.le.s32.totalorder 1, %s16
      %p203 = scmp.lt.s32.totalorder %s16, 3
      %p204 = pnand %p202, %p203
      %p205 = pneg %p204
      // Predicated region
      $region9: #{tpu_custom_call.1} parent=5 // pred_check
        _
      $region10: #{tpu_custom_call.1} parent=5 // pred_check_branch
        %207 = sbr.rel (%p204) target = $region12
      $region11: #{tpu_custom_call.1} parent=5 // pred_region
        %s208 = ssub.s32 %s16, 1
        // Predicated region
        $region13: #{tpu_custom_call.1} parent=11 // pred_check
          %p209 = pneg %p63
        $region14: #{tpu_custom_call.1} parent=11 // pred_check_branch
          %211 = sbr.rel (%p209) target = $region16
        $region15: #{tpu_custom_call.1} parent=11 // pred_region
          _
        $region16: #{tpu_custom_call.1} parent=11 // pred_fallthru
          _
        // Predicated region
        $region17: #{tpu_custom_call.1} parent=11 // pred_check
          %p212 = pneg %p84
        $region18: #{tpu_custom_call.1} parent=11 // pred_check_branch
          %214 = sbr.rel (%p212) target = $region20
        $region19: #{tpu_custom_call.1} parent=11 // pred_region
          _
        $region20: #{tpu_custom_call.1} parent=11 // pred_fallthru
          _
        // Predicated region
        $region21: #{tpu_custom_call.1} parent=11 // pred_check
          %p215 = pneg %p105
        $region22: #{tpu_custom_call.1} parent=11 // pred_check_branch
          %217 = sbr.rel (%p215) target = $region24
        $region23: #{tpu_custom_call.1} parent=11 // pred_region
          _
        $region24: #{tpu_custom_call.1} parent=11 // pred_fallthru
          _
        // Predicated region
        $region25: #{tpu_custom_call.1} parent=11 // pred_check
          %p218 = pneg %p126
        $region26: #{tpu_custom_call.1} parent=11 // pred_check_branch
          %220 = sbr.rel (%p218) target = $region28
        $region27: #{tpu_custom_call.1} parent=11 // pred_region
          _
        $region28: #{tpu_custom_call.1} parent=11 // pred_fallthru
          _
        // Predicated region
        $region29: #{tpu_custom_call.1} parent=11 // pred_check
          %p221 = pneg %p147
        $region30: #{tpu_custom_call.1} parent=11 // pred_check_branch
          %223 = sbr.rel (%p221) target = $region32
        $region31: #{tpu_custom_call.1} parent=11 // pred_region
          _
        $region32: #{tpu_custom_call.1} parent=11 // pred_fallthru
          _
        // Predicated region
        $region33: #{tpu_custom_call.1} parent=11 // pred_check
          %p224 = pneg %p168
        $region34: #{tpu_custom_call.1} parent=11 // pred_check_branch
          %226 = sbr.rel (%p224) target = $region36
        $region35: #{tpu_custom_call.1} parent=11 // pred_region
          _
        $region36: #{tpu_custom_call.1} parent=11 // pred_fallthru
          _
      $region12: #{tpu_custom_call.1} parent=5 // pred_fallthru
        _
      %p227 = scmp.lt.s32.totalorder %s16, 2
      // Predicated region
      $region37: #{tpu_custom_call.1} parent=5 // pred_check
        %p228 = pneg %p227
      $region38: #{tpu_custom_call.1} parent=5 // pred_check_branch
        %230 = sbr.rel (%p228) target = $region40
      $region39: #{tpu_custom_call.1} parent=5 // pred_region
        // Predicated region
        $region41: #{tpu_custom_call.1} parent=39 // pred_check
          %p231 = pneg %p36
        $region42: #{tpu_custom_call.1} parent=39 // pred_check_branch
          %233 = sbr.rel (%p231) target = $region44
        $region43: #{tpu_custom_call.1} parent=39 // pred_region
          %s234 = smul.u32 32, %s16
          %p235 = scmp.lt.s32.totalorder %s234, 63
          %s236 = scalar_select %p235, %s234, 63
          %s237 = smul.addr %s236, 8
          %s238 = scalar_lea.vmem %s0, %s237
          %s239 = smul.u32 32, %s16
        $region44: #{tpu_custom_call.1} parent=39 // pred_fallthru
          _
      $region40: #{tpu_custom_call.1} parent=5 // pred_fallthru
        _
      %p240 = scmp.le.s32.totalorder 1, %s16
      %p241 = scmp.lt.s32.totalorder %s16, 3
      %p242 = pnand %p240, %p241
      %p243 = pneg %p242
      // Predicated region
      $region45: #{tpu_custom_call.1} parent=5 // pred_check
        _
      $region46: #{tpu_custom_call.1} parent=5 // pred_check_branch
        %245 = sbr.rel (%p242) target = $region48
      $region47: #{tpu_custom_call.1} parent=5 // pred_region
        %s246 = ssub.s32 %s16, 1
        %s247 = smul.u32 32, %s21
        %p248 = scmp.lt.s32.totalorder %s247, 63
        %s249 = scalar_select %p248, %s247, 63
        %s250 = smul.addr %s249, 8
        %s251 = scalar_lea.vmem %s0, %s250
        %p252 = pneg %p42
        %p253 = pneg %p39
        %p254 = pneg %p63
        %p255 = pneg %p60
        %p256 = pneg %p84
        %p257 = pneg %p81
        %p258 = pneg %p105
        %p259 = pneg %p102
        %p260 = pneg %p126
        %p261 = pneg %p123
        %p262 = pneg %p147
        %p263 = pneg %p144
        %p264 = pneg %p168
        %p265 = pneg %p165
        %p266 = pneg %p194
        %p267 = pneg %p191
        %s268 = sand.u32 %s181, 1
        %s269 = scalar_lea.sflag [#allocation3], %s268
        %s270 = sand.u32 %s181, 1
        %s271 = smul.addr %s270, 256
        %s272 = scalar_lea.vmem [#allocation2], %s271
        %s273 = smul.u32 32, %s21
        %p274 = scmp.lt.s32.totalorder %s273, 63
        %s275 = scalar_select %p274, %s273, 63
        %s276 = smul.addr %s275, 8
        %s277 = scalar_lea.vmem %s0, %s276
        %s278 = smul.u32 32, %s21
        %s279 = smul.u32 32, %s21
        %v281 = vld [vmem:[%s277] sm:$0xff]
        %v282 = vld [vmem:[%s277 + $0x8] sm:$0xff]
        %v283 = vld [vmem:[%s277 + $0x10] sm:$0xff]
        %v284 = vld [vmem:[%s277 + $0x18] sm:$0xff]
        %v285 = vld [vmem:[%s277 + $0x20] sm:$0xff]
        %v286 = vld [vmem:[%s277 + $0x28] sm:$0xff]
        %v287 = vld [vmem:[%s277 + $0x30] sm:$0xff]
        %v288 = vld [vmem:[%s277 + $0x38] sm:$0xff]
        %v289 = vld [vmem:[%s277 + $0x40] sm:$0xff]
        %v290 = vld [vmem:[%s277 + $0x48] sm:$0xff]
        %v291 = vld [vmem:[%s277 + $0x50] sm:$0xff]
        %v292 = vld [vmem:[%s277 + $0x58] sm:$0xff]
        %v293 = vld [vmem:[%s277 + $0x60] sm:$0xff]
        %v294 = vld [vmem:[%s277 + $0x68] sm:$0xff]
        %v295 = vld [vmem:[%s277 + $0x70] sm:$0xff]
        %v296 = vld [vmem:[%s277 + $0x78] sm:$0xff]
        %v297 = vld [vmem:[%s277 + $0x80] sm:$0xff]
        %v298 = vld [vmem:[%s277 + $0x88] sm:$0xff]
        %v299 = vld [vmem:[%s277 + $0x90] sm:$0xff]
        %v300 = vld [vmem:[%s277 + $0x98] sm:$0xff]
        %v301 = vld [vmem:[%s277 + $0xa0] sm:$0xff]
        %v302 = vld [vmem:[%s277 + $0xa8] sm:$0xff]
        %v303 = vld [vmem:[%s277 + $0xb0] sm:$0xff]
        %v304 = vld [vmem:[%s277 + $0xb8] sm:$0xff]
        %v305 = vld [vmem:[%s277 + $0xc0] sm:$0xff]
        %v306 = vld [vmem:[%s277 + $0xc8] sm:$0xff]
        %v307 = vld [vmem:[%s277 + $0xd0] sm:$0xff]
        %v308 = vld [vmem:[%s277 + $0xd8] sm:$0xff]
        %v309 = vld [vmem:[%s277 + $0xe0] sm:$0xff]
        %v310 = vld [vmem:[%s277 + $0xe8] sm:$0xff]
        %v311 = vld [vmem:[%s277 + $0xf0] sm:$0xff]
        %v312 = vld [vmem:[%s277 + $0xf8] sm:$0xff]
        %v313 = vld [vmem:[%s1] sm:$0xf]
        %v314 = vld [vmem:[%s2] sm:$0x1]
        %v315 = vpack.c.bf16 %v282, %v281
        %v316 = vpack.c.bf16 %v284, %v283
        %v317 = vpack.c.bf16 %v286, %v285
        %v318 = vpack.c.bf16 %v288, %v287
        %v319 = vpack.c.bf16 %v290, %v289
        %v320 = vpack.c.bf16 %v292, %v291
        %v321 = vpack.c.bf16 %v294, %v293
        %v322 = vpack.c.bf16 %v296, %v295
        %v323 = vpack.c.bf16 %v298, %v297
        %v324 = vpack.c.bf16 %v300, %v299
        %v325 = vpack.c.bf16 %v302, %v301
        %v326 = vpack.c.bf16 %v304, %v303
        %v327 = vpack.c.bf16 %v306, %v305
        %v328 = vpack.c.bf16 %v308, %v307
        %v329 = vpack.c.bf16 %v310, %v309
        %v330 = vpack.c.bf16 %v312, %v311
        %v332 = vlaneseq
        %v333 = vshrl.u32 %v332, 7
        %v334 = vsub.s32 0, %v333
        %v335 = vrot.slane %v314, %v334
        %vm337 = vcmask 64512
        %v339 = vsel %vm337, %v315, 0
        %v342 = vsel %vm337, %v316, 0
        %v345 = vsel %vm337, %v317, 0
        %v348 = vsel %vm337, %v318, 0
        %v351 = vsel %vm337, %v319, 0
        %v354 = vsel %vm337, %v320, 0
        %v357 = vsel %vm337, %v321, 0
        %v360 = vsel %vm337, %v322, 0
        %v363 = vsel %vm337, %v323, 0
        %v366 = vsel %vm337, %v324, 0
        %v369 = vsel %vm337, %v325, 0
        %v372 = vsel %vm337, %v326, 0
        %v375 = vsel %vm337, %v327, 0
        %v378 = vsel %vm337, %v328, 0
        %v381 = vsel %vm337, %v329, 0
        %v384 = vsel %vm337, %v330, 0
        %vm386 = vcmask 1043456
        %v388 = vsel %vm386, %v313, 0
        %390 = vmatprep.subr.bf16.mxu0 0
        %391 = vmatpush1.bf16.msra.mxu0 %v388
        %392 = vmatprep.subr.bf16.mxu0 0
        %393 = vmatpush1.bf16.msra.mxu0 0
        %394 = vmatprep.subr.bf16.mxu0 0
        %395 = vmatpush1.bf16.msra.mxu0 0
        %396 = vmatprep.subr.bf16.mxu0 0
        %397 = vmatpush1.bf16.msra.mxu0 0
        %398 = vmatprep.subr.bf16.mxu0 0
        %399 = vmatpush1.bf16.msra.mxu0 0
        %400 = vmatprep.subr.bf16.mxu0 0
        %401 = vmatpush1.bf16.msra.mxu0 0
        %402 = vmatprep.subr.bf16.mxu0 0
        %403 = vmatpush1.bf16.msra.mxu0 0
        %404 = vmatprep.subr.bf16.mxu0 0
        %405 = vmatpush1.bf16.msra.mxu0 0
        %406 = vmatprep.subr.bf16.mxu0 0
        %407 = vmatpush1.bf16.msra.mxu0 0
        %408 = vmatprep.subr.bf16.mxu0 0
        %409 = vmatpush1.bf16.msra.mxu0 0
        %410 = vmatprep.subr.bf16.mxu0 0
        %411 = vmatpush1.bf16.msra.mxu0 0
        %412 = vmatprep.subr.bf16.mxu0 0
        %413 = vmatpush1.bf16.msra.mxu0 0
        %414 = vmatprep.subr.bf16.mxu0 0
        %415 = vmatpush1.bf16.msra.mxu0 0
        %416 = vmatprep.subr.bf16.mxu0 0
        %417 = vmatpush1.bf16.msra.mxu0 0
        %418 = vmatprep.subr.bf16.mxu0 0
        %419 = vmatpush1.bf16.msra.mxu0 0
        %420 = vmatprep.subr.bf16.mxu0 0
        %421 = vmatpush1.bf16.msra.mxu0 0
        %422 = vmatprep.mubr.bf16.mxu0 0
        %423 = vmatmul.mubr.bf16.gmra.mrb[0].mxu0 %v339
        %v424 = vpop.f32.mrb[0].mxu0
        %v425 = vadd.f32 %v335, %v424
        %v426 = vpop.f32.mrb[0].mxu0
        %v427 = vpop.f32.mrb[0].mxu0
        %v428 = vadd.f32 %v335, %v427
        %v429 = vpop.f32.mrb[0].mxu0
        %430 = vmatprep.mubr.bf16.mxu0 0
        %431 = vmatmul.mubr.bf16.gmra.mrb[0].mxu0 %v342
        %v432 = vpop.f32.mrb[0].mxu0
        %v433 = vadd.f32 %v335, %v432
        %v434 = vpop.f32.mrb[0].mxu0
        %v435 = vpop.f32.mrb[0].mxu0
        %v436 = vadd.f32 %v335, %v435
        %v437 = vpop.f32.mrb[0].mxu0
        %438 = vmatprep.mubr.bf16.mxu0 0
        %439 = vmatmul.mubr.bf16.gmra.mrb[0].mxu0 %v345
        %v440 = vpop.f32.mrb[0].mxu0
        %v441 = vadd.f32 %v335, %v440
        %v442 = vpop.f32.mrb[0].mxu0
        %v443 = vpop.f32.mrb[0].mxu0
        %v444 = vadd.f32 %v335, %v443
        %v445 = vpop.f32.mrb[0].mxu0
        %446 = vmatprep.mubr.bf16.mxu0 0
        %447 = vmatmul.mubr.bf16.gmra.mrb[0].mxu0 %v348
        %v448 = vpop.f32.mrb[0].mxu0
        %v449 = vadd.f32 %v335, %v448
        %v450 = vpop.f32.mrb[0].mxu0
        %v451 = vpop.f32.mrb[0].mxu0
        %v452 = vadd.f32 %v335, %v451
        %v453 = vpop.f32.mrb[0].mxu0
        %454 = vmatprep.mubr.bf16.mxu0 0
        %455 = vmatmul.mubr.bf16.gmra.mrb[0].mxu0 %v351
        %v456 = vpop.f32.mrb[0].mxu0
        %v457 = vadd.f32 %v335, %v456
        %v458 = vpop.f32.mrb[0].mxu0
        %v459 = vpop.f32.mrb[0].mxu0
        %v460 = vadd.f32 %v335, %v459
        %v461 = vpop.f32.mrb[0].mxu0
        %462 = vmatprep.mubr.bf16.mxu0 0
        %463 = vmatmul.mubr.bf16.gmra.mrb[0].mxu0 %v354
        %v464 = vpop.f32.mrb[0].mxu0
        %v465 = vadd.f32 %v335, %v464
        %v466 = vpop.f32.mrb[0].mxu0
        %v467 = vpop.f32.mrb[0].mxu0
        %v468 = vadd.f32 %v335, %v467
        %v469 = vpop.f32.mrb[0].mxu0
        %470 = vmatprep.mubr.bf16.mxu0 0
        %471 = vmatmul.mubr.bf16.gmra.mrb[0].mxu0 %v357
        %v472 = vpop.f32.mrb[0].mxu0
        %v473 = vadd.f32 %v335, %v472
        %v474 = vpop.f32.mrb[0].mxu0
        %v475 = vpop.f32.mrb[0].mxu0
        %v476 = vadd.f32 %v335, %v475
        %v477 = vpop.f32.mrb[0].mxu0
        %478 = vmatprep.mubr.bf16.mxu0 0
        %479 = vmatmul.mubr.bf16.gmra.mrb[0].mxu0 %v360
        %v480 = vpop.f32.mrb[0].mxu0
        %v481 = vadd.f32 %v335, %v480
        %v482 = vpop.f32.mrb[0].mxu0
        %v483 = vpop.f32.mrb[0].mxu0
        %v484 = vadd.f32 %v335, %v483
        %v485 = vpop.f32.mrb[0].mxu0
        %486 = vmatprep.mubr.bf16.mxu0 0
        %487 = vmatmul.mubr.bf16.gmra.mrb[0].mxu0 %v363
        %v488 = vpop.f32.mrb[0].mxu0
        %v489 = vadd.f32 %v335, %v488
        %v490 = vpop.f32.mrb[0].mxu0
        %v491 = vpop.f32.mrb[0].mxu0
        %v492 = vadd.f32 %v335, %v491
        %v493 = vpop.f32.mrb[0].mxu0
        %494 = vmatprep.mubr.bf16.mxu0 0
        %495 = vmatmul.mubr.bf16.gmra.mrb[0].mxu0 %v366
        %v496 = vpop.f32.mrb[0].mxu0
        %v497 = vadd.f32 %v335, %v496
        %v498 = vpop.f32.mrb[0].mxu0
        %v499 = vpop.f32.mrb[0].mxu0
        %v500 = vadd.f32 %v335, %v499
        %v501 = vpop.f32.mrb[0].mxu0
        %502 = vmatprep.mubr.bf16.mxu0 0
        %503 = vmatmul.mubr.bf16.gmra.mrb[0].mxu0 %v369
        %v504 = vpop.f32.mrb[0].mxu0
        %v505 = vadd.f32 %v335, %v504
        %v506 = vpop.f32.mrb[0].mxu0
        %v507 = vpop.f32.mrb[0].mxu0
        %v508 = vadd.f32 %v335, %v507
        %v509 = vpop.f32.mrb[0].mxu0
        %510 = vmatprep.mubr.bf16.mxu0 0
        %511 = vmatmul.mubr.bf16.gmra.mrb[0].mxu0 %v372
        %v512 = vpop.f32.mrb[0].mxu0
        %v513 = vadd.f32 %v335, %v512
        %v514 = vpop.f32.mrb[0].mxu0
        %v515 = vpop.f32.mrb[0].mxu0
        %v516 = vadd.f32 %v335, %v515
        %v517 = vpop.f32.mrb[0].mxu0
        %518 = vmatprep.mubr.bf16.mxu0 0
        %519 = vmatmul.mubr.bf16.gmra.mrb[0].mxu0 %v375
        %v520 = vpop.f32.mrb[0].mxu0
        %v521 = vadd.f32 %v335, %v520
        %v522 = vpop.f32.mrb[0].mxu0
        %v523 = vpop.f32.mrb[0].mxu0
        %v524 = vadd.f32 %v335, %v523
        %v525 = vpop.f32.mrb[0].mxu0
        %526 = vmatprep.mubr.bf16.mxu0 0
        %527 = vmatmul.mubr.bf16.gmra.mrb[0].mxu0 %v378
        %v528 = vpop.f32.mrb[0].mxu0
        %v529 = vadd.f32 %v335, %v528
        %v530 = vpop.f32.mrb[0].mxu0
        %v531 = vpop.f32.mrb[0].mxu0
        %v532 = vadd.f32 %v335, %v531
        %v533 = vpop.f32.mrb[0].mxu0
        %534 = vmatprep.mubr.bf16.mxu0 0
        %535 = vmatmul.mubr.bf16.gmra.mrb[0].mxu0 %v381
        %v536 = vpop.f32.mrb[0].mxu0
        %v537 = vadd.f32 %v335, %v536
        %v538 = vpop.f32.mrb[0].mxu0
        %v539 = vpop.f32.mrb[0].mxu0
        %v540 = vadd.f32 %v335, %v539
        %v541 = vpop.f32.mrb[0].mxu0
        %542 = vmatprep.mubr.bf16.mxu0 0
        %543 = vmatmul.mubr.bf16.gmra.mrb[0].mxu0 %v384
        %v544 = vpop.f32.mrb[0].mxu0
        %v545 = vadd.f32 %v335, %v544
        %v546 = vpop.f32.mrb[0].mxu0
        %v547 = vpop.f32.mrb[0].mxu0
        %v548 = vadd.f32 %v335, %v547
        %v549 = vpop.f32.mrb[0].mxu0
        %550 = vdwg.mxu0
        %v551 = vmax.f32 %v425, 0.0
        %v552 = vmax.f32 %v428, 0.0
        %v553 = vmax.f32 %v433, 0.0
        %v554 = vmax.f32 %v436, 0.0
        %v555 = vmax.f32 %v441, 0.0
        %v556 = vmax.f32 %v444, 0.0
        %v557 = vmax.f32 %v449, 0.0
        %v558 = vmax.f32 %v452, 0.0
        %v559 = vmax.f32 %v457, 0.0
        %v560 = vmax.f32 %v460, 0.0
        %v561 = vmax.f32 %v465, 0.0
        %v562 = vmax.f32 %v468, 0.0
        %v563 = vmax.f32 %v473, 0.0
        %v564 = vmax.f32 %v476, 0.0
        %v565 = vmax.f32 %v481, 0.0
        %v566 = vmax.f32 %v484, 0.0
        %v567 = vmax.f32 %v489, 0.0
        %v568 = vmax.f32 %v492, 0.0
        %v569 = vmax.f32 %v497, 0.0
        %v570 = vmax.f32 %v500, 0.0
        %v571 = vmax.f32 %v505, 0.0
        %v572 = vmax.f32 %v508, 0.0
        %v573 = vmax.f32 %v513, 0.0
        %v574 = vmax.f32 %v516, 0.0
        %v575 = vmax.f32 %v521, 0.0
        %v576 = vmax.f32 %v524, 0.0
        %v577 = vmax.f32 %v529, 0.0
        %v578 = vmax.f32 %v532, 0.0
        %v579 = vmax.f32 %v537, 0.0
        %v580 = vmax.f32 %v540, 0.0
        %v581 = vmax.f32 %v545, 0.0
        %v582 = vmax.f32 %v548, 0.0
        %v583 = vld [vmem:[%s3] sm:$0xf]
        %v584 = vld [vmem:[%s3 + $0x4] sm:$0xf]
        %v585 = vld [vmem:[%s3 + $0x8] sm:$0xf]
        %v586 = vld [vmem:[%s3 + $0xc] sm:$0xf]
        %v587 = vld [vmem:[%s3 + $0x10] sm:$0xf]
        %v588 = vld [vmem:[%s3 + $0x14] sm:$0xf]
        %v589 = vld [vmem:[%s3 + $0x18] sm:$0xf]
        %v590 = vld [vmem:[%s3 + $0x1c] sm:$0xf]
        %v591 = vld [vmem:[%s3 + $0x20] sm:$0xf]
        %v592 = vld [vmem:[%s3 + $0x24] sm:$0xf]
        %v593 = vld [vmem:[%s3 + $0x28] sm:$0xf]
        %v594 = vld [vmem:[%s3 + $0x2c] sm:$0xf]
        %v595 = vld [vmem:[%s3 + $0x30] sm:$0xf]
        %v596 = vld [vmem:[%s3 + $0x34] sm:$0xf]
        %v597 = vld [vmem:[%s3 + $0x38] sm:$0xf]
        %v598 = vld [vmem:[%s3 + $0x3c] sm:$0xf]
        %v599 = vld [vmem:[%s4] sm:$0x1]
        %v600 = vpack.c.bf16 %v552, %v551
        %v601 = vpack.c.bf16 %v554, %v553
        %v602 = vpack.c.bf16 %v556, %v555
        %v603 = vpack.c.bf16 %v558, %v557
        %v604 = vpack.c.bf16 %v560, %v559
        %v605 = vpack.c.bf16 %v562, %v561
        %v606 = vpack.c.bf16 %v564, %v563
        %v607 = vpack.c.bf16 %v566, %v565
        %v608 = vpack.c.bf16 %v568, %v567
        %v609 = vpack.c.bf16 %v570, %v569
        %v610 = vpack.c.bf16 %v572, %v571
        %v611 = vpack.c.bf16 %v574, %v573
        %v612 = vpack.c.bf16 %v576, %v575
        %v613 = vpack.c.bf16 %v578, %v577
        %v614 = vpack.c.bf16 %v580, %v579
        %v615 = vpack.c.bf16 %v582, %v581
        %v617 = vlaneseq
        %v618 = vshrl.u32 %v617, 7
        %v619 = vsub.s32 0, %v618
        %v620 = vrot.slane %v599, %v619
        %v638 = vunpack.c.l.b16 %v583
        %v639 = vunpack.c.l.b16 %v584
        %v640 = vunpack.c.l.b16 %v585
        %v641 = vunpack.c.l.b16 %v586
        %v642 = vunpack.c.l.b16 %v587
        %v643 = vunpack.c.l.b16 %v588
        %v644 = vunpack.c.l.b16 %v589
        %v645 = vunpack.c.l.b16 %v590
        %v646 = vunpack.c.l.b16 %v591
        %v647 = vunpack.c.l.b16 %v592
        %v648 = vunpack.c.l.b16 %v593
        %v649 = vunpack.c.l.b16 %v594
        %v650 = vunpack.c.l.b16 %v595
        %v651 = vunpack.c.l.b16 %v596
        %v652 = vunpack.c.l.b16 %v597
        %v653 = vunpack.c.l.b16 %v598
        %v654 = vpack.c.b16 %v639, %v638
        %v655 = vpack.c.b16 %v641, %v640
        %v656 = vpack.c.b16 %v643, %v642
        %v657 = vpack.c.b16 %v645, %v644
        %v658 = vpack.c.b16 %v647, %v646
        %v659 = vpack.c.b16 %v649, %v648
        %v660 = vpack.c.b16 %v651, %v650
        %v661 = vpack.c.b16 %v653, %v652
        %670 = vmatprep.subr.bf16.mxu0 0
        %671 = vmatpush1.bf16.msra.mxu0 %v654
        %672 = vmatprep.subr.bf16.mxu0 0
        %673 = vmatpush1.bf16.msra.mxu0 %v655
        %674 = vmatprep.subr.bf16.mxu0 0
        %675 = vmatpush1.bf16.msra.mxu0 %v656
        %676 = vmatprep.subr.bf16.mxu0 0
        %677 = vmatpush1.bf16.msra.mxu0 %v657
        %678 = vmatprep.subr.bf16.mxu0 0
        %679 = vmatpush1.bf16.msra.mxu0 %v658
        %680 = vmatprep.subr.bf16.mxu0 0
        %681 = vmatpush1.bf16.msra.mxu0 %v659
        %682 = vmatprep.subr.bf16.mxu0 0
        %683 = vmatpush1.bf16.msra.mxu0 %v660
        %684 = vmatprep.subr.bf16.mxu0 0
        %685 = vmatpush1.bf16.msra.mxu0 %v661
        %686 = vmatprep.subr.bf16.mxu0 0
        %687 = vmatpush1.bf16.msra.mxu0 0
        %688 = vmatprep.subr.bf16.mxu0 0
        %689 = vmatpush1.bf16.msra.mxu0 0
        %690 = vmatprep.subr.bf16.mxu0 0
        %691 = vmatpush1.bf16.msra.mxu0 0
        %692 = vmatprep.subr.bf16.mxu0 0
        %693 = vmatpush1.bf16.msra.mxu0 0
        %694 = vmatprep.subr.bf16.mxu0 0
        %695 = vmatpush1.bf16.msra.mxu0 0
        %696 = vmatprep.subr.bf16.mxu0 0
        %697 = vmatpush1.bf16.msra.mxu0 0
        %698 = vmatprep.subr.bf16.mxu0 0
        %699 = vmatpush1.bf16.msra.mxu0 0
        %700 = vmatprep.subr.bf16.mxu0 0
        %701 = vmatpush1.bf16.msra.mxu0 0
        %702 = vmatprep.mubr.bf16.mxu0 0
        %703 = vmatmul.mubr.bf16.gmra.mrb[0].mxu0 %v600
        %v704 = vpop.f32.mrb[0].mxu0
        %v705 = vadd.f32 %v620, %v704
        %v706 = vpop.f32.mrb[0].mxu0
        %v707 = vpop.f32.mrb[0].mxu0
        %v708 = vadd.f32 %v620, %v707
        %v709 = vpop.f32.mrb[0].mxu0
        %710 = vmatprep.mubr.bf16.mxu0 0
        %711 = vmatmul.mubr.bf16.gmra.mrb[0].mxu0 %v601
        %v712 = vpop.f32.mrb[0].mxu0
        %v713 = vadd.f32 %v620, %v712
        %v714 = vpop.f32.mrb[0].mxu0
        %v715 = vpop.f32.mrb[0].mxu0
        %v716 = vadd.f32 %v620, %v715
        %v717 = vpop.f32.mrb[0].mxu0
        %718 = vmatprep.mubr.bf16.mxu0 0
        %719 = vmatmul.mubr.bf16.gmra.mrb[0].mxu0 %v602
        %v720 = vpop.f32.mrb[0].mxu0
        %v721 = vadd.f32 %v620, %v720
        %v722 = vpop.f32.mrb[0].mxu0
        %v723 = vpop.f32.mrb[0].mxu0
        %v724 = vadd.f32 %v620, %v723
        %v725 = vpop.f32.mrb[0].mxu0
        %726 = vmatprep.mubr.bf16.mxu0 0
        %727 = vmatmul.mubr.bf16.gmra.mrb[0].mxu0 %v603
        %v728 = vpop.f32.mrb[0].mxu0
        %v729 = vadd.f32 %v620, %v728
        %v730 = vpop.f32.mrb[0].mxu0
        %v731 = vpop.f32.mrb[0].mxu0
        %v732 = vadd.f32 %v620, %v731
        %v733 = vpop.f32.mrb[0].mxu0
        %734 = vmatprep.mubr.bf16.mxu0 0
        %735 = vmatmul.mubr.bf16.gmra.mrb[0].mxu0 %v604
        %v736 = vpop.f32.mrb[0].mxu0
        %v737 = vadd.f32 %v620, %v736
        %v738 = vpop.f32.mrb[0].mxu0
        %v739 = vpop.f32.mrb[0].mxu0
        %v740 = vadd.f32 %v620, %v739
        %v741 = vpop.f32.mrb[0].mxu0
        %742 = vmatprep.mubr.bf16.mxu0 0
        %743 = vmatmul.mubr.bf16.gmra.mrb[0].mxu0 %v605
        %v744 = vpop.f32.mrb[0].mxu0
        %v745 = vadd.f32 %v620, %v744
        %v746 = vpop.f32.mrb[0].mxu0
        %v747 = vpop.f32.mrb[0].mxu0
        %v748 = vadd.f32 %v620, %v747
        %v749 = vpop.f32.mrb[0].mxu0
        %750 = vmatprep.mubr.bf16.mxu0 0
        %751 = vmatmul.mubr.bf16.gmra.mrb[0].mxu0 %v606
        %v752 = vpop.f32.mrb[0].mxu0
        %v753 = vadd.f32 %v620, %v752
        %v754 = vpop.f32.mrb[0].mxu0
        %v755 = vpop.f32.mrb[0].mxu0
        %v756 = vadd.f32 %v620, %v755
        %v757 = vpop.f32.mrb[0].mxu0
        %758 = vmatprep.mubr.bf16.mxu0 0
        %759 = vmatmul.mubr.bf16.gmra.mrb[0].mxu0 %v607
        %v760 = vpop.f32.mrb[0].mxu0
        %v761 = vadd.f32 %v620, %v760
        %v762 = vpop.f32.mrb[0].mxu0
        %v763 = vpop.f32.mrb[0].mxu0
        %v764 = vadd.f32 %v620, %v763
        %v765 = vpop.f32.mrb[0].mxu0
        %766 = vmatprep.mubr.bf16.mxu0 0
        %767 = vmatmul.mubr.bf16.gmra.mrb[0].mxu0 %v608
        %v768 = vpop.f32.mrb[0].mxu0
        %v769 = vadd.f32 %v620, %v768
        %v770 = vpop.f32.mrb[0].mxu0
        %v771 = vpop.f32.mrb[0].mxu0
        %v772 = vadd.f32 %v620, %v771
        %v773 = vpop.f32.mrb[0].mxu0
        %774 = vmatprep.mubr.bf16.mxu0 0
        %775 = vmatmul.mubr.bf16.gmra.mrb[0].mxu0 %v609
        %v776 = vpop.f32.mrb[0].mxu0
        %v777 = vadd.f32 %v620, %v776
        %v778 = vpop.f32.mrb[0].mxu0
        %v779 = vpop.f32.mrb[0].mxu0
        %v780 = vadd.f32 %v620, %v779
        %v781 = vpop.f32.mrb[0].mxu0
        %782 = vmatprep.mubr.bf16.mxu0 0
        %783 = vmatmul.mubr.bf16.gmra.mrb[0].mxu0 %v610
        %v784 = vpop.f32.mrb[0].mxu0
        %v785 = vadd.f32 %v620, %v784
        %v786 = vpop.f32.mrb[0].mxu0
        %v787 = vpop.f32.mrb[0].mxu0
        %v788 = vadd.f32 %v620, %v787
        %v789 = vpop.f32.mrb[0].mxu0
        %790 = vmatprep.mubr.bf16.mxu0 0
        %791 = vmatmul.mubr.bf16.gmra.mrb[0].mxu0 %v611
        %v792 = vpop.f32.mrb[0].mxu0
        %v793 = vadd.f32 %v620, %v792
        %v794 = vpop.f32.mrb[0].mxu0
        %v795 = vpop.f32.mrb[0].mxu0
        %v796 = vadd.f32 %v620, %v795
        %v797 = vpop.f32.mrb[0].mxu0
        %798 = vmatprep.mubr.bf16.mxu0 0
        %799 = vmatmul.mubr.bf16.gmra.mrb[0].mxu0 %v612
        %v800 = vpop.f32.mrb[0].mxu0
        %v801 = vadd.f32 %v620, %v800
        %v802 = vpop.f32.mrb[0].mxu0
        %v803 = vpop.f32.mrb[0].mxu0
        %v804 = vadd.f32 %v620, %v803
        %v805 = vpop.f32.mrb[0].mxu0
        %806 = vmatprep.mubr.bf16.mxu0 0
        %807 = vmatmul.mubr.bf16.gmra.mrb[0].mxu0 %v613
        %v808 = vpop.f32.mrb[0].mxu0
        %v809 = vadd.f32 %v620, %v808
        %v810 = vpop.f32.mrb[0].mxu0
        %v811 = vpop.f32.mrb[0].mxu0
        %v812 = vadd.f32 %v620, %v811
        %v813 = vpop.f32.mrb[0].mxu0
        %814 = vmatprep.mubr.bf16.mxu0 0
        %815 = vmatmul.mubr.bf16.gmra.mrb[0].mxu0 %v614
        %v816 = vpop.f32.mrb[0].mxu0
        %v817 = vadd.f32 %v620, %v816
        %v818 = vpop.f32.mrb[0].mxu0
        %v819 = vpop.f32.mrb[0].mxu0
        %v820 = vadd.f32 %v620, %v819
        %v821 = vpop.f32.mrb[0].mxu0
        %822 = vmatprep.mubr.bf16.mxu0 0
        %823 = vmatmul.mubr.bf16.gmra.mrb[0].mxu0 %v615
        %v824 = vpop.f32.mrb[0].mxu0
        %v825 = vadd.f32 %v620, %v824
        %v826 = vpop.f32.mrb[0].mxu0
        %v827 = vpop.f32.mrb[0].mxu0
        %v828 = vadd.f32 %v620, %v827
        %v829 = vpop.f32.mrb[0].mxu0
        %830 = vdwg.mxu0
        %v831 = vmax.f32 %v705, 0.0
        %v832 = vmax.f32 %v708, 0.0
        %v833 = vmax.f32 %v713, 0.0
        %v834 = vmax.f32 %v716, 0.0
        %v835 = vmax.f32 %v721, 0.0
        %v836 = vmax.f32 %v724, 0.0
        %v837 = vmax.f32 %v729, 0.0
        %v838 = vmax.f32 %v732, 0.0
        %v839 = vmax.f32 %v737, 0.0
        %v840 = vmax.f32 %v740, 0.0
        %v841 = vmax.f32 %v745, 0.0
        %v842 = vmax.f32 %v748, 0.0
        %v843 = vmax.f32 %v753, 0.0
        %v844 = vmax.f32 %v756, 0.0
        %v845 = vmax.f32 %v761, 0.0
        %v846 = vmax.f32 %v764, 0.0
        %v847 = vmax.f32 %v769, 0.0
        %v848 = vmax.f32 %v772, 0.0
        %v849 = vmax.f32 %v777, 0.0
        %v850 = vmax.f32 %v780, 0.0
        %v851 = vmax.f32 %v785, 0.0
        %v852 = vmax.f32 %v788, 0.0
        %v853 = vmax.f32 %v793, 0.0
        %v854 = vmax.f32 %v796, 0.0
        %v855 = vmax.f32 %v801, 0.0
        %v856 = vmax.f32 %v804, 0.0
        %v857 = vmax.f32 %v809, 0.0
        %v858 = vmax.f32 %v812, 0.0
        %v859 = vmax.f32 %v817, 0.0
        %v860 = vmax.f32 %v820, 0.0
        %v861 = vmax.f32 %v825, 0.0
        %v862 = vmax.f32 %v828, 0.0
        %v863 = vld [vmem:[%s5] sm:$0xf]
        %v864 = vld [vmem:[%s5 + $0x4] sm:$0xf]
        %v865 = vld [vmem:[%s5 + $0x8] sm:$0xf]
        %v866 = vld [vmem:[%s5 + $0xc] sm:$0xf]
        %v867 = vld [vmem:[%s5 + $0x10] sm:$0xf]
        %v868 = vld [vmem:[%s5 + $0x14] sm:$0xf]
        %v869 = vld [vmem:[%s5 + $0x18] sm:$0xf]
        %v870 = vld [vmem:[%s5 + $0x1c] sm:$0xf]
        %v871 = vld [vmem:[%s5 + $0x20] sm:$0xf]
        %v872 = vld [vmem:[%s5 + $0x24] sm:$0xf]
        %v873 = vld [vmem:[%s5 + $0x28] sm:$0xf]
        %v874 = vld [vmem:[%s5 + $0x2c] sm:$0xf]
        %v875 = vld [vmem:[%s5 + $0x30] sm:$0xf]
        %v876 = vld [vmem:[%s5 + $0x34] sm:$0xf]
        %v877 = vld [vmem:[%s5 + $0x38] sm:$0xf]
        %v878 = vld [vmem:[%s5 + $0x3c] sm:$0xf]
        %v879 = vld [vmem:[%s6] sm:$0x1]
        %v880 = vpack.c.bf16 %v832, %v831
        %v881 = vpack.c.bf16 %v834, %v833
        %v882 = vpack.c.bf16 %v836, %v835
        %v883 = vpack.c.bf16 %v838, %v837
        %v884 = vpack.c.bf16 %v840, %v839
        %v885 = vpack.c.bf16 %v842, %v841
        %v886 = vpack.c.bf16 %v844, %v843
        %v887 = vpack.c.bf16 %v846, %v845
        %v888 = vpack.c.bf16 %v848, %v847
        %v889 = vpack.c.bf16 %v850, %v849
        %v890 = vpack.c.bf16 %v852, %v851
        %v891 = vpack.c.bf16 %v854, %v853
        %v892 = vpack.c.bf16 %v856, %v855
        %v893 = vpack.c.bf16 %v858, %v857
        %v894 = vpack.c.bf16 %v860, %v859
        %v895 = vpack.c.bf16 %v862, %v861
        %v897 = vlaneseq
        %v898 = vshrl.u32 %v897, 7
        %v899 = vsub.s32 0, %v898
        %v900 = vrot.slane %v879, %v899
        %v918 = vunpack.c.l.b16 %v863
        %v919 = vunpack.c.l.b16 %v864
        %v920 = vunpack.c.l.b16 %v865
        %v921 = vunpack.c.l.b16 %v866
        %v922 = vunpack.c.l.b16 %v867
        %v923 = vunpack.c.l.b16 %v868
        %v924 = vunpack.c.l.b16 %v869
        %v925 = vunpack.c.l.b16 %v870
        %v926 = vunpack.c.l.b16 %v871
        %v927 = vunpack.c.l.b16 %v872
        %v928 = vunpack.c.l.b16 %v873
        %v929 = vunpack.c.l.b16 %v874
        %v930 = vunpack.c.l.b16 %v875
        %v931 = vunpack.c.l.b16 %v876
        %v932 = vunpack.c.l.b16 %v877
        %v933 = vunpack.c.l.b16 %v878
        %v934 = vpack.c.b16 %v919, %v918
        %v935 = vpack.c.b16 %v921, %v920
        %v936 = vpack.c.b16 %v923, %v922
        %v937 = vpack.c.b16 %v925, %v924
        %v938 = vpack.c.b16 %v927, %v926
        %v939 = vpack.c.b16 %v929, %v928
        %v940 = vpack.c.b16 %v931, %v930
        %v941 = vpack.c.b16 %v933, %v932
        %950 = vmatprep.subr.bf16.mxu0 0
        %951 = vmatpush1.bf16.msra.mxu0 %v934
        %952 = vmatprep.subr.bf16.mxu0 0
        %953 = vmatpush1.bf16.msra.mxu0 %v935
        %954 = vmatprep.subr.bf16.mxu0 0
        %955 = vmatpush1.bf16.msra.mxu0 %v936
        %956 = vmatprep.subr.bf16.mxu0 0
        %957 = vmatpush1.bf16.msra.mxu0 %v937
        %958 = vmatprep.subr.bf16.mxu0 0
        %959 = vmatpush1.bf16.msra.mxu0 %v938
        %960 = vmatprep.subr.bf16.mxu0 0
        %961 = vmatpush1.bf16.msra.mxu0 %v939
        %962 = vmatprep.subr.bf16.mxu0 0
        %963 = vmatpush1.bf16.msra.mxu0 %v940
        %964 = vmatprep.subr.bf16.mxu0 0
        %965 = vmatpush1.bf16.msra.mxu0 %v941
        %966 = vmatprep.subr.bf16.mxu0 0
        %967 = vmatpush1.bf16.msra.mxu0 0
        %968 = vmatprep.subr.bf16.mxu0 0
        %969 = vmatpush1.bf16.msra.mxu0 0
        %970 = vmatprep.subr.bf16.mxu0 0
        %971 = vmatpush1.bf16.msra.mxu0 0
        %972 = vmatprep.subr.bf16.mxu0 0
        %973 = vmatpush1.bf16.msra.mxu0 0
        %974 = vmatprep.subr.bf16.mxu0 0
        %975 = vmatpush1.bf16.msra.mxu0 0
        %976 = vmatprep.subr.bf16.mxu0 0
        %977 = vmatpush1.bf16.msra.mxu0 0
        %978 = vmatprep.subr.bf16.mxu0 0
        %979 = vmatpush1.bf16.msra.mxu0 0
        %980 = vmatprep.subr.bf16.mxu0 0
        %981 = vmatpush1.bf16.msra.mxu0 0
        %982 = vmatprep.mubr.bf16.mxu0 0
        %983 = vmatmul.mubr.bf16.gmra.mrb[0].mxu0 %v880
        %v984 = vpop.f32.mrb[0].mxu0
        %v985 = vadd.f32 %v900, %v984
        %v986 = vpop.f32.mrb[0].mxu0
        %v987 = vpop.f32.mrb[0].mxu0
        %v988 = vadd.f32 %v900, %v987
        %v989 = vpop.f32.mrb[0].mxu0
        %990 = vmatprep.mubr.bf16.mxu0 0
        %991 = vmatmul.mubr.bf16.gmra.mrb[0].mxu0 %v881
        %v992 = vpop.f32.mrb[0].mxu0
        %v993 = vadd.f32 %v900, %v992
        %v994 = vpop.f32.mrb[0].mxu0
        %v995 = vpop.f32.mrb[0].mxu0
        %v996 = vadd.f32 %v900, %v995
        %v997 = vpop.f32.mrb[0].mxu0
        %998 = vmatprep.mubr.bf16.mxu0 0
        %999 = vmatmul.mubr.bf16.gmra.mrb[0].mxu0 %v882
        %v1000 = vpop.f32.mrb[0].mxu0
        %v1001 = vadd.f32 %v900, %v1000
        %v1002 = vpop.f32.mrb[0].mxu0
        %v1003 = vpop.f32.mrb[0].mxu0
        %v1004 = vadd.f32 %v900, %v1003
        %v1005 = vpop.f32.mrb[0].mxu0
        %1006 = vmatprep.mubr.bf16.mxu0 0
        %1007 = vmatmul.mubr.bf16.gmra.mrb[0].mxu0 %v883
        %v1008 = vpop.f32.mrb[0].mxu0
        %v1009 = vadd.f32 %v900, %v1008
        %v1010 = vpop.f32.mrb[0].mxu0
        %v1011 = vpop.f32.mrb[0].mxu0
        %v1012 = vadd.f32 %v900, %v1011
        %v1013 = vpop.f32.mrb[0].mxu0
        %1014 = vmatprep.mubr.bf16.mxu0 0
        %1015 = vmatmul.mubr.bf16.gmra.mrb[0].mxu0 %v884
        %v1016 = vpop.f32.mrb[0].mxu0
        %v1017 = vadd.f32 %v900, %v1016
        %v1018 = vpop.f32.mrb[0].mxu0
        %v1019 = vpop.f32.mrb[0].mxu0
        %v1020 = vadd.f32 %v900, %v1019
        %v1021 = vpop.f32.mrb[0].mxu0
        %1022 = vmatprep.mubr.bf16.mxu0 0
        %1023 = vmatmul.mubr.bf16.gmra.mrb[0].mxu0 %v885
        %v1024 = vpop.f32.mrb[0].mxu0
        %v1025 = vadd.f32 %v900, %v1024
        %v1026 = vpop.f32.mrb[0].mxu0
        %v1027 = vpop.f32.mrb[0].mxu0
        %v1028 = vadd.f32 %v900, %v1027
        %v1029 = vpop.f32.mrb[0].mxu0
        %1030 = vmatprep.mubr.bf16.mxu0 0
        %1031 = vmatmul.mubr.bf16.gmra.mrb[0].mxu0 %v886
        %v1032 = vpop.f32.mrb[0].mxu0
        %v1033 = vadd.f32 %v900, %v1032
        %v1034 = vpop.f32.mrb[0].mxu0
        %v1035 = vpop.f32.mrb[0].mxu0
        %v1036 = vadd.f32 %v900, %v1035
        %v1037 = vpop.f32.mrb[0].mxu0
        %1038 = vmatprep.mubr.bf16.mxu0 0
        %1039 = vmatmul.mubr.bf16.gmra.mrb[0].mxu0 %v887
        %v1040 = vpop.f32.mrb[0].mxu0
        %v1041 = vadd.f32 %v900, %v1040
        %v1042 = vpop.f32.mrb[0].mxu0
        %v1043 = vpop.f32.mrb[0].mxu0
        %v1044 = vadd.f32 %v900, %v1043
        %v1045 = vpop.f32.mrb[0].mxu0
        %1046 = vmatprep.mubr.bf16.mxu0 0
        %1047 = vmatmul.mubr.bf16.gmra.mrb[0].mxu0 %v888
        %v1048 = vpop.f32.mrb[0].mxu0
        %v1049 = vadd.f32 %v900, %v1048
        %v1050 = vpop.f32.mrb[0].mxu0
        %v1051 = vpop.f32.mrb[0].mxu0
        %v1052 = vadd.f32 %v900, %v1051
        %v1053 = vpop.f32.mrb[0].mxu0
        %1054 = vmatprep.mubr.bf16.mxu0 0
        %1055 = vmatmul.mubr.bf16.gmra.mrb[0].mxu0 %v889
        %v1056 = vpop.f32.mrb[0].mxu0
        %v1057 = vadd.f32 %v900, %v1056
        %v1058 = vpop.f32.mrb[0].mxu0
        %v1059 = vpop.f32.mrb[0].mxu0
        %v1060 = vadd.f32 %v900, %v1059
        %v1061 = vpop.f32.mrb[0].mxu0
        %1062 = vmatprep.mubr.bf16.mxu0 0
        %1063 = vmatmul.mubr.bf16.gmra.mrb[0].mxu0 %v890
        %v1064 = vpop.f32.mrb[0].mxu0
        %v1065 = vadd.f32 %v900, %v1064
        %v1066 = vpop.f32.mrb[0].mxu0
        %v1067 = vpop.f32.mrb[0].mxu0
        %v1068 = vadd.f32 %v900, %v1067
        %v1069 = vpop.f32.mrb[0].mxu0
        %1070 = vmatprep.mubr.bf16.mxu0 0
        %1071 = vmatmul.mubr.bf16.gmra.mrb[0].mxu0 %v891
        %v1072 = vpop.f32.mrb[0].mxu0
        %v1073 = vadd.f32 %v900, %v1072
        %v1074 = vpop.f32.mrb[0].mxu0
        %v1075 = vpop.f32.mrb[0].mxu0
        %v1076 = vadd.f32 %v900, %v1075
        %v1077 = vpop.f32.mrb[0].mxu0
        %1078 = vmatprep.mubr.bf16.mxu0 0
        %1079 = vmatmul.mubr.bf16.gmra.mrb[0].mxu0 %v892
        %v1080 = vpop.f32.mrb[0].mxu0
        %v1081 = vadd.f32 %v900, %v1080
        %v1082 = vpop.f32.mrb[0].mxu0
        %v1083 = vpop.f32.mrb[0].mxu0
        %v1084 = vadd.f32 %v900, %v1083
        %v1085 = vpop.f32.mrb[0].mxu0
        %1086 = vmatprep.mubr.bf16.mxu0 0
        %1087 = vmatmul.mubr.bf16.gmra.mrb[0].mxu0 %v893
        %v1088 = vpop.f32.mrb[0].mxu0
        %v1089 = vadd.f32 %v900, %v1088
        %v1090 = vpop.f32.mrb[0].mxu0
        %v1091 = vpop.f32.mrb[0].mxu0
        %v1092 = vadd.f32 %v900, %v1091
        %v1093 = vpop.f32.mrb[0].mxu0
        %1094 = vmatprep.mubr.bf16.mxu0 0
        %1095 = vmatmul.mubr.bf16.gmra.mrb[0].mxu0 %v894
        %v1096 = vpop.f32.mrb[0].mxu0
        %v1097 = vadd.f32 %v900, %v1096
        %v1098 = vpop.f32.mrb[0].mxu0
        %v1099 = vpop.f32.mrb[0].mxu0
        %v1100 = vadd.f32 %v900, %v1099
        %v1101 = vpop.f32.mrb[0].mxu0
        %1102 = vmatprep.mubr.bf16.mxu0 0
        %1103 = vmatmul.mubr.bf16.gmra.mrb[0].mxu0 %v895
        %v1104 = vpop.f32.mrb[0].mxu0
        %v1105 = vadd.f32 %v900, %v1104
        %v1106 = vpop.f32.mrb[0].mxu0
        %v1107 = vpop.f32.mrb[0].mxu0
        %v1108 = vadd.f32 %v900, %v1107
        %v1109 = vpop.f32.mrb[0].mxu0
        %1110 = vdwg.mxu0
        %1111 = vst [vmem:[%s272] sm:$0xff] %v985
        %1112 = vst [vmem:[%s272 + $0x8] sm:$0xff] %v988
        %1113 = vst [vmem:[%s272 + $0x10] sm:$0xff] %v993
        %1114 = vst [vmem:[%s272 + $0x18] sm:$0xff] %v996
        %1115 = vst [vmem:[%s272 + $0x20] sm:$0xff] %v1001
        %1116 = vst [vmem:[%s272 + $0x28] sm:$0xff] %v1004
        %1117 = vst [vmem:[%s272 + $0x30] sm:$0xff] %v1009
        %1118 = vst [vmem:[%s272 + $0x38] sm:$0xff] %v1012
        %1119 = vst [vmem:[%s272 + $0x40] sm:$0xff] %v1017
        %1120 = vst [vmem:[%s272 + $0x48] sm:$0xff] %v1020
        %1121 = vst [vmem:[%s272 + $0x50] sm:$0xff] %v1025
        %1122 = vst [vmem:[%s272 + $0x58] sm:$0xff] %v1028
        %1123 = vst [vmem:[%s272 + $0x60] sm:$0xff] %v1033
        %1124 = vst [vmem:[%s272 + $0x68] sm:$0xff] %v1036
        %1125 = vst [vmem:[%s272 + $0x70] sm:$0xff] %v1041
        %1126 = vst [vmem:[%s272 + $0x78] sm:$0xff] %v1044
        %1127 = vst [vmem:[%s272 + $0x80] sm:$0xff] %v1049
        %1128 = vst [vmem:[%s272 + $0x88] sm:$0xff] %v1052
        %1129 = vst [vmem:[%s272 + $0x90] sm:$0xff] %v1057
        %1130 = vst [vmem:[%s272 + $0x98] sm:$0xff] %v1060
        %1131 = vst [vmem:[%s272 + $0xa0] sm:$0xff] %v1065
        %1132 = vst [vmem:[%s272 + $0xa8] sm:$0xff] %v1068
        %1133 = vst [vmem:[%s272 + $0xb0] sm:$0xff] %v1073
        %1134 = vst [vmem:[%s272 + $0xb8] sm:$0xff] %v1076
        %1135 = vst [vmem:[%s272 + $0xc0] sm:$0xff] %v1081
        %1136 = vst [vmem:[%s272 + $0xc8] sm:$0xff] %v1084
        %1137 = vst [vmem:[%s272 + $0xd0] sm:$0xff] %v1089
        %1138 = vst [vmem:[%s272 + $0xd8] sm:$0xff] %v1092
        %1139 = vst [vmem:[%s272 + $0xe0] sm:$0xff] %v1097
        %1140 = vst [vmem:[%s272 + $0xe8] sm:$0xff] %v1100
        %1141 = vst [vmem:[%s272 + $0xf0] sm:$0xff] %v1105
        %1142 = vst [vmem:[%s272 + $0xf8] sm:$0xff] %v1108
        %s1143 = sand.u32 %s181, 1
        %s1144 = scalar_lea.sflag [#allocation3], %s1143
        %s1145 = sand.u32 %s181, 1
        %s1146 = smul.addr %s1145, 256
        %s1147 = scalar_lea.vmem [#allocation2], %s1146
        // Predicated region
        $region49: #{tpu_custom_call.1} parent=47 // pred_check
          %p1148 = pneg %p191
        $region50: #{tpu_custom_call.1} parent=47 // pred_check_branch
          %1150 = sbr.rel (%p1148) target = $region52
        $region51: #{tpu_custom_call.1} parent=47 // pred_region
          %s1151 = smul.u32 32, %s21
          %s1153 = ssub.s32 4096, 4096
          %1154 = vsyncadd %s1144, %s1153
          %s1155 = smul.addr %s1151, 128
          %s1156 = scalar_lea.hbm %s7, %s1155
          %s1157 = sshll.u32 %s1147, 4
          %s1158 = int_to_ptr.vmem [resolvable:$true] %s1157
          %1163 = dma.vmem_to_hbm [thread:$0]  %s1158, 4096, %s1156, %s1144, 128, 128, 8
        $region52: #{tpu_custom_call.1} parent=47 // pred_fallthru
          _
      $region48: #{tpu_custom_call.1} parent=5 // pred_fallthru
        _
      %p1164 = scmp.le.s32.totalorder 2, %s16
      // Predicated region
      $region53: #{tpu_custom_call.1} parent=5 // pred_check
        %p1165 = pneg %p1164
      $region54: #{tpu_custom_call.1} parent=5 // pred_check_branch
        %1167 = sbr.rel (%p1165) target = $region56
      $region55: #{tpu_custom_call.1} parent=5 // pred_region
        %s1168 = ssub.s32 %s16, 2
        // Predicated region
        $region57: #{tpu_custom_call.1} parent=55 // pred_check
          %p1169 = pneg %p197
        $region58: #{tpu_custom_call.1} parent=55 // pred_check_branch
          %1171 = sbr.rel (%p1169) target = $region60
        $region59: #{tpu_custom_call.1} parent=55 // pred_region
          %s1172 = sand.u32 %s182, 1
          %s1173 = scalar_lea.sflag [#allocation3], %s1172
          %s1174 = sand.u32 %s182, 1
          %s1175 = smul.addr %s1174, 256
          %s1176 = scalar_lea.vmem [#allocation2], %s1175
          %1177 = dma.done %s1173, 4096
        $region60: #{tpu_custom_call.1} parent=55 // pred_fallthru
          _
      $region56: #{tpu_custom_call.1} parent=5 // pred_fallthru
        _
    $region6: #{tpu_custom_call.1} parent=1 // loop_footer
      %s20 = sadd.s32 1, %s16
    $region7: #{tpu_custom_call.1} parent=1 // loop_footer_branch
      %15 = sbr.rel target = $region3
    $region8: #{tpu_custom_call.1} parent=1 // loop_exit
      _
    %1178 = vsyncpa [#allocation3], 1
    %s1179 = scalar_lea.sflag [#allocation3], 1
    %1180 = vsyncpa %s1179, 1

</llo_original>
